<compile_context>
chip_gen: v7x
topology: tpu7x:2x2x1
jax: 0.10.0
libtpu: 0.0.40
codegen_flags: <defaults>
</compile_context>

<pallas_src>
import functools

import jax
import jax.numpy as jnp
import numpy as np
from jax import lax
from jax.experimental import pallas as pl
from jax.experimental.pallas import tpu as pltpu


# ---------------------------- config (small, synthetic) ----------------------
class Config:
    n_vocab = 32
    embedding = 32          # E
    max_seq_len = 16        # L
    num_class = 4           # C
    padding_idx = 0
    Ci = 1
    num_filters = 16        # F (kernel_num)
    kernel_size = (3, 4, 5) # Ks
    dropout = 0.5
    static = False


def _round_up(x, m):
    return (x + m - 1) // m * m


# ---------------------------- Pallas kernel ----------------------------------
def _textcnn_kernel(Kmax, L, V, D_pad, B_TILE,
                    tokw_ref, tbl_ref, cbias_ref, mask_ref,
                    fc1w_ref, fc1b_ref, fc2w_ref, fc2b_ref, out_ref):
    """Forward for one batch tile of B_TILE sentences.

    tokw_ref  : (B_TILE*L, Kmax) int32, column k = token id at time t+k
                (wrap rows are don't-care: masked or zero-weighted)
    tbl_ref   : (Kmax, V, D_pad) bf16, tbl[k] = embed @ packed_conv_w[k]
    cbias_ref : (1, D_pad) f32 packed conv biases
    mask_ref  : (L, D_pad) f32 additive mask, 0 for t < Lout(lane) else -1e30
    fc1*/fc2* : lane-padded FC weights (bf16) / biases (f32)
    out_ref   : (B_TILE, 128) f32 (only lanes [0, C) meaningful)
    """
    M = B_TILE * L
    iota_v = lax.broadcasted_iota(jnp.int32, (M, V), 1)          # (M, V)

    # ---- conv: one packed matmul per tap, embedding folded into the table ----
    acc = None
    for k in range(Kmax):
        tok_k = tokw_ref[:, k:k + 1]                             # (M, 1) int32
        oh = (tok_k == iota_v).astype(jnp.bfloat16)              # exact 0/1 one-hot
        yk = jnp.dot(oh, tbl_ref[k], preferred_element_type=jnp.float32)  # (M, D_pad)
        acc = yk if acc is None else acc + yk

    # ---- time max-pool with per-branch validity mask -------------------------
    acc = acc.reshape(B_TILE, L, D_pad) + mask_ref[...][None, :, :]
    pooled = jnp.max(acc, axis=1)                                # (B_TILE, D_pad)
    # bias + ReLU after the (monotone) max — exactly equivalent, cheaper.
    feat = jnp.maximum(pooled + cbias_ref[...], 0.0)

    # ---- feed_forward: (Dropout) Linear -> (Dropout) ReLU -> Linear -> Sigmoid
    h = jnp.dot(feat.astype(jnp.bfloat16), fc1w_ref[...],
                preferred_element_type=jnp.float32)
    h = jnp.maximum(h + fc1b_ref[...], 0.0)
    o = jnp.dot(h.astype(jnp.bfloat16), fc2w_ref[...],
                preferred_element_type=jnp.float32)
    out_ref[...] = jax.nn.sigmoid(o + fc2b_ref[...]).astype(out_ref.dtype)


# ---------------------------- wrapper -----------------------------------------
def complete_short_sentence(x, max_seq_len, padding_idx):
    B, S = x.shape
    if S >= max_seq_len:
        return x[:, :max_seq_len]
    pad = jnp.full((B, max_seq_len - S), padding_idx, dtype=x.dtype)
    return jnp.concatenate([x, pad], axis=1)


def _pack_params(params, cfg):
    """Fold embedding into per-tap tables, pack branches into disjoint lanes,
    pad everything lane-dense (D_pad = 128, C_pad = 128)."""
    Ks = tuple(cfg.kernel_size)
    E, F, C, V, L = (cfg.embedding, cfg.num_filters, cfg.num_class,
                     cfg.n_vocab, cfg.max_seq_len)
    n = len(Ks)
    Kmax = max(Ks)
    D = n * F
    D_pad = _round_up(D, 128)
    C_pad = _round_up(C, 128)

    embed = params["embed"].astype(jnp.float32)                  # (V, E)

    tbl = jnp.zeros((Kmax, V, D_pad), jnp.float32)
    cbias = jnp.zeros((1, D_pad), jnp.float32)
    lout = np.full((D_pad,), L, np.int32)                        # padded lanes: always valid
    for i, K in enumerate(Ks):
        w = params["conv_w"][i].astype(jnp.float32)              # (K, E, F)
        t_i = jnp.einsum("ve,kef->kvf", embed, w)                # (K, V, F) folded table
        tbl = tbl.at[:K, :, i * F:(i + 1) * F].set(t_i)
        cbias = cbias.at[:, i * F:(i + 1) * F].set(
            params["conv_b"][i][None, :].astype(jnp.float32))
        lout[i * F:(i + 1) * F] = L - K + 1

    # additive pre-max mask: 0 where time row valid for that lane, else -1e30
    t_ids = np.arange(L)[:, None]
    mask = np.where(t_ids < lout[None, :], 0.0, -1e30).astype(np.float32)

    fc1_w = jnp.zeros((D_pad, D_pad), jnp.float32).at[:D, :D].set(
        params["fc1_w"].astype(jnp.float32))
    fc1_b = jnp.zeros((1, D_pad), jnp.float32).at[:, :D].set(
        params["fc1_b"][None, :].astype(jnp.float32))
    fc2_w = jnp.zeros((D_pad, C_pad), jnp.float32).at[:D, :C].set(
        params["fc2_w"].astype(jnp.float32))
    fc2_b = jnp.zeros((1, C_pad), jnp.float32).at[:, :C].set(
        params["fc2_b"][None, :].astype(jnp.float32))

    packed = dict(
        tbl=tbl.astype(jnp.bfloat16),
        cbias=cbias,
        mask=jnp.asarray(mask),
        fc1_w=fc1_w.astype(jnp.bfloat16), fc1_b=fc1_b,
        fc2_w=fc2_w.astype(jnp.bfloat16), fc2_b=fc2_b,
    )
    return packed, D_pad, C_pad, Kmax


def textcnn_forward(tokens, params, cfg, b_tile=256):
    Ks = tuple(cfg.kernel_size)
    L, V, C = cfg.max_seq_len, cfg.n_vocab, cfg.num_class
    B = tokens.shape[0]

    packed, D_pad, C_pad, Kmax = _pack_params(params, cfg)

    # Batch tile: multiple of 8 sublanes, large M for MXU fill, but keep the
    # grid >= 2 steps when the batch allows it (v7x megacore sharding).
    half = -(-B // 2)
    B_TILE = max(8, min(_round_up(b_tile, 8), _round_up(half, 8)))
    B_pad = _round_up(B, B_TILE)

    x = complete_short_sentence(tokens.astype(jnp.int32), L, cfg.padding_idx)
    if B_pad > B:
        x = jnp.concatenate(
            [x, jnp.full((B_pad - B, L), cfg.padding_idx, jnp.int32)], axis=0)

    # Pre-shifted token columns: tok_win[m, k] = token id at row m+k (flat).
    # Wrapped rows only ever feed time rows that are masked (or zero-weighted),
    # so the global roll is safe across sentence / tile boundaries.
    x_flat = x.reshape(B_pad * L)
    tok_win = jnp.stack([jnp.roll(x_flat, -k) for k in range(Kmax)], axis=1)
    tok_win = tok_win.astype(jnp.int32)                          # (B_pad*L, Kmax)

    operands = [tok_win, packed["tbl"], packed["cbias"], packed["mask"],
                packed["fc1_w"], packed["fc1_b"], packed["fc2_w"], packed["fc2_b"]]
    in_specs = [
        pl.BlockSpec((B_TILE * L, Kmax), lambda b: (b, 0)),
        pl.BlockSpec((Kmax, V, D_pad), lambda b: (0, 0, 0)),
        pl.BlockSpec((1, D_pad), lambda b: (0, 0)),
        pl.BlockSpec((L, D_pad), lambda b: (0, 0)),
        pl.BlockSpec((D_pad, D_pad), lambda b: (0, 0)),
        pl.BlockSpec((1, D_pad), lambda b: (0, 0)),
        pl.BlockSpec((D_pad, C_pad), lambda b: (0, 0)),
        pl.BlockSpec((1, C_pad), lambda b: (0, 0)),
    ]

    kernel = functools.partial(_textcnn_kernel, Kmax, L, V, D_pad, B_TILE)

    out = pl.pallas_call(
        kernel,
        out_shape=jax.ShapeDtypeStruct((B_pad, C_pad), jnp.float32),
        grid_spec=pltpu.PrefetchScalarGridSpec(
            num_scalar_prefetch=0,
            grid=(B_pad // B_TILE,),
            in_specs=in_specs,
            out_specs=pl.BlockSpec((B_TILE, C_pad), lambda b: (b, 0)),
        ),
        compiler_params=pltpu.CompilerParams(
            dimension_semantics=("parallel",),
            vmem_limit_bytes=32 * 1024 * 1024,
        ),
    )(*operands)
    return out[:B, :C]


# ---------------------------- pure-JAX reference ------------------------------
def textcnn_reference(tokens, params, cfg):
    Ks = tuple(cfg.kernel_size)
    L = cfg.max_seq_len
    x = complete_short_sentence(tokens.astype(jnp.int32), L, cfg.padding_idx)
    emb = jnp.take(params["embed"], x, axis=0).astype(jnp.float32)  # (B, L, E)
    feats = []
    for i, K in enumerate(Ks):
        Lout = L - K + 1
        windows = jnp.stack([emb[:, k:k + Lout, :] for k in range(K)], axis=2)  # (B,Lout,K,E)
        out = jnp.einsum("btke,kef->btf", windows, params["conv_w"][i]) + params["conv_b"][i]
        out = jax.nn.relu(out)
        feats.append(out.max(axis=1))
    feat = jnp.concatenate(feats, axis=1)
    h = jax.nn.relu(feat @ params["fc1_w"] + params["fc1_b"])
    return jax.nn.sigmoid(h @ params["fc2_w"] + params["fc2_b"])


# ---------------------------- parameter init ----------------------------------
def init_params(cfg, key):
    Ks = tuple(cfg.kernel_size)
    E, F = cfg.embedding, cfg.num_filters
    D = len(Ks) * F
    keys = jax.random.split(key, 6 + 2 * len(Ks))
    embed = 0.1 * jax.random.normal(keys[0], (cfg.n_vocab, E), jnp.float32)
    embed = embed.at[cfg.padding_idx].set(0.0)  # nn.Embedding padding_idx row is zero
    conv_w, conv_b = [], []
    for i, K in enumerate(Ks):
        conv_w.append(0.05 * jax.random.normal(keys[1 + 2 * i], (K, E, F), jnp.float32))
        conv_b.append(0.05 * jax.random.normal(keys[2 + 2 * i], (F,), jnp.float32))
    o = 1 + 2 * len(Ks)
    return dict(
        embed=embed,
        conv_w=conv_w,
        conv_b=conv_b,
        fc1_w=0.1 * jax.random.normal(keys[o + 0], (D, D), jnp.float32),
        fc1_b=0.1 * jax.random.normal(keys[o + 1], (D,), jnp.float32),
        fc2_w=0.1 * jax.random.normal(keys[o + 2], (D, cfg.num_class), jnp.float32),
        fc2_b=0.1 * jax.random.normal(keys[o + 3], (cfg.num_class,), jnp.float32),
    )


# ---------------------------- main --------------------------------------------
if __name__ == "__main__":
    cfg = Config()
    key = jax.random.PRNGKey(0)
    k_par, k_tok, k_tok2 = jax.random.split(key, 3)

    params = init_params(cfg, k_par)

    # bf16 matmul operands -> relaxed tolerance (see perf review).
    TOL = dict(rtol=2e-2, atol=2e-2)

    # Small case: seq < max_seq_len -> exercises the padding branch.
    B, S = 2, 8
    tokens = jax.random.randint(k_tok, (B, S), 0, cfg.n_vocab, dtype=jnp.int32)
    out = jax.block_until_ready(textcnn_forward(tokens, params, cfg))
    ref = jax.block_until_ready(textcnn_reference(tokens, params, cfg))
    np.testing.assert_allclose(np.asarray(out), np.asarray(ref), **TOL)
    assert out.shape == (B, cfg.num_class)

    # Larger case: multi-tile grid, batch padding, and seq > max_seq_len truncation.
    B2, S2 = 130, 20
    tokens2 = jax.random.randint(k_tok2, (B2, S2), 0, cfg.n_vocab, dtype=jnp.int32)
    out2 = jax.block_until_ready(textcnn_forward(tokens2, params, cfg))
    ref2 = jax.block_until_ready(textcnn_reference(tokens2, params, cfg))
    np.testing.assert_allclose(np.asarray(out2), np.asarray(ref2), **TOL)
    assert out2.shape == (B2, cfg.num_class)

    print("KERNEL_OK")
</pallas_src>

<mosaic_0001>
module attributes {stable_mosaic.version = 11 : i64} {
  func.func @_textcnn_kernel(%arg0: i32, %arg1: memref<128x5xi32, #tpu.memory_space<vmem>>, %arg2: memref<5x32x128xbf16, #tpu.memory_space<vmem>>, %arg3: memref<1x128xf32, #tpu.memory_space<vmem>>, %arg4: memref<16x128xf32, #tpu.memory_space<vmem>>, %arg5: memref<128x128xbf16, #tpu.memory_space<vmem>>, %arg6: memref<1x128xf32, #tpu.memory_space<vmem>>, %arg7: memref<128x128xbf16, #tpu.memory_space<vmem>>, %arg8: memref<1x128xf32, #tpu.memory_space<vmem>>, %arg9: memref<8x128xf32, #tpu.memory_space<vmem>>) attributes {dimension_semantics = [#tpu.dimension_semantics<parallel>], iteration_bounds = array<i64: 1>, scalar_prefetch = 0 : i64, scratch_operands = 0 : i64, tpu.core_type = #tpu.core_type<tc>, window_params = [{transform_indices = @transform_0, window_bounds = array<i64: 128, 5>}, {pipeline_mode = #tpu.pipeline_mode<synchronous>, transform_indices = @transform_1, window_bounds = array<i64: 5, 32, 128>}, {pipeline_mode = #tpu.pipeline_mode<synchronous>, transform_indices = @transform_2, window_bounds = array<i64: 1, 128>}, {pipeline_mode = #tpu.pipeline_mode<synchronous>, transform_indices = @transform_3, window_bounds = array<i64: 16, 128>}, {pipeline_mode = #tpu.pipeline_mode<synchronous>, transform_indices = @transform_4, window_bounds = array<i64: 128, 128>}, {pipeline_mode = #tpu.pipeline_mode<synchronous>, transform_indices = @transform_5, window_bounds = array<i64: 1, 128>}, {pipeline_mode = #tpu.pipeline_mode<synchronous>, transform_indices = @transform_6, window_bounds = array<i64: 128, 128>}, {pipeline_mode = #tpu.pipeline_mode<synchronous>, transform_indices = @transform_7, window_bounds = array<i64: 1, 128>}, {transform_indices = @transform_8, window_bounds = array<i64: 8, 128>}]} {
    %0 = tpu.iota {dimensions = array<i32: 1>} : vector<128x32xi32>
    %c0 = arith.constant 0 : index
    %c0_0 = arith.constant 0 : index
    %1 = vector.load %arg1[%c0, %c0_0] : memref<128x5xi32, #tpu.memory_space<vmem>>, vector<128x1xi32>
    %2 = vector.broadcast %1 : vector<128x1xi32> to vector<128x32xi32>
    %3 = arith.cmpi eq, %2, %0 : vector<128x32xi32>
    %4 = arith.extui %3 : vector<128x32xi1> to vector<128x32xi32>
    %5 = arith.sitofp %4 : vector<128x32xi32> to vector<128x32xf32>
    %6 = arith.truncf %5 : vector<128x32xf32> to vector<128x32xbf16>
    %c0_1 = arith.constant 0 : index
    %c0_2 = arith.constant 0 : index
    %c0_3 = arith.constant 0 : index
    %7 = vector.load %arg2[%c0_1, %c0_2, %c0_3] : memref<5x32x128xbf16, #tpu.memory_space<vmem>>, vector<1x32x128xbf16>
    %8 = vector.shape_cast %7 : vector<1x32x128xbf16> to vector<32x128xbf16>
    %cst = arith.constant dense<0.000000e+00> : vector<128x128xf32>
    %9 = tpu.matmul %6, %8, %cst {dimension_numbers = #tpu.dot_dimension_numbers<[1], [0], [0], [1], [0, 0, 1, 1], [], []>} : vector<128x32xbf16>, vector<32x128xbf16>, vector<128x128xf32> -> vector<128x128xf32>
    %c0_4 = arith.constant 0 : index
    %c1 = arith.constant 1 : index
    %10 = vector.load %arg1[%c0_4, %c1] : memref<128x5xi32, #tpu.memory_space<vmem>>, vector<128x1xi32>
    %11 = vector.broadcast %10 : vector<128x1xi32> to vector<128x32xi32>
    %12 = arith.cmpi eq, %11, %0 : vector<128x32xi32>
    %13 = arith.extui %12 : vector<128x32xi1> to vector<128x32xi32>
    %14 = arith.sitofp %13 : vector<128x32xi32> to vector<128x32xf32>
    %15 = arith.truncf %14 : vector<128x32xf32> to vector<128x32xbf16>
    %c1_5 = arith.constant 1 : index
    %c0_6 = arith.constant 0 : index
    %c0_7 = arith.constant 0 : index
    %16 = vector.load %arg2[%c1_5, %c0_6, %c0_7] : memref<5x32x128xbf16, #tpu.memory_space<vmem>>, vector<1x32x128xbf16>
    %17 = vector.shape_cast %16 : vector<1x32x128xbf16> to vector<32x128xbf16>
    %cst_8 = arith.constant dense<0.000000e+00> : vector<128x128xf32>
    %18 = tpu.matmul %15, %17, %cst_8 {dimension_numbers = #tpu.dot_dimension_numbers<[1], [0], [0], [1], [0, 0, 1, 1], [], []>} : vector<128x32xbf16>, vector<32x128xbf16>, vector<128x128xf32> -> vector<128x128xf32>
    %19 = arith.addf %9, %18 : vector<128x128xf32>
    %c0_9 = arith.constant 0 : index
    %c2 = arith.constant 2 : index
    %20 = vector.load %arg1[%c0_9, %c2] : memref<128x5xi32, #tpu.memory_space<vmem>>, vector<128x1xi32>
    %21 = vector.broadcast %20 : vector<128x1xi32> to vector<128x32xi32>
    %22 = arith.cmpi eq, %21, %0 : vector<128x32xi32>
    %23 = arith.extui %22 : vector<128x32xi1> to vector<128x32xi32>
    %24 = arith.sitofp %23 : vector<128x32xi32> to vector<128x32xf32>
    %25 = arith.truncf %24 : vector<128x32xf32> to vector<128x32xbf16>
    %c2_10 = arith.constant 2 : index
    %c0_11 = arith.constant 0 : index
    %c0_12 = arith.constant 0 : index
    %26 = vector.load %arg2[%c2_10, %c0_11, %c0_12] : memref<5x32x128xbf16, #tpu.memory_space<vmem>>, vector<1x32x128xbf16>
    %27 = vector.shape_cast %26 : vector<1x32x128xbf16> to vector<32x128xbf16>
    %cst_13 = arith.constant dense<0.000000e+00> : vector<128x128xf32>
    %28 = tpu.matmul %25, %27, %cst_13 {dimension_numbers = #tpu.dot_dimension_numbers<[1], [0], [0], [1], [0, 0, 1, 1], [], []>} : vector<128x32xbf16>, vector<32x128xbf16>, vector<128x128xf32> -> vector<128x128xf32>
    %29 = arith.addf %19, %28 : vector<128x128xf32>
    %c0_14 = arith.constant 0 : index
    %c3 = arith.constant 3 : index
    %30 = vector.load %arg1[%c0_14, %c3] : memref<128x5xi32, #tpu.memory_space<vmem>>, vector<128x1xi32>
    %31 = vector.broadcast %30 : vector<128x1xi32> to vector<128x32xi32>
    %32 = arith.cmpi eq, %31, %0 : vector<128x32xi32>
    %33 = arith.extui %32 : vector<128x32xi1> to vector<128x32xi32>
    %34 = arith.sitofp %33 : vector<128x32xi32> to vector<128x32xf32>
    %35 = arith.truncf %34 : vector<128x32xf32> to vector<128x32xbf16>
    %c3_15 = arith.constant 3 : index
    %c0_16 = arith.constant 0 : index
    %c0_17 = arith.constant 0 : index
    %36 = vector.load %arg2[%c3_15, %c0_16, %c0_17] : memref<5x32x128xbf16, #tpu.memory_space<vmem>>, vector<1x32x128xbf16>
    %37 = vector.shape_cast %36 : vector<1x32x128xbf16> to vector<32x128xbf16>
    %cst_18 = arith.constant dense<0.000000e+00> : vector<128x128xf32>
    %38 = tpu.matmul %35, %37, %cst_18 {dimension_numbers = #tpu.dot_dimension_numbers<[1], [0], [0], [1], [0, 0, 1, 1], [], []>} : vector<128x32xbf16>, vector<32x128xbf16>, vector<128x128xf32> -> vector<128x128xf32>
    %39 = arith.addf %29, %38 : vector<128x128xf32>
    %c0_19 = arith.constant 0 : index
    %c4 = arith.constant 4 : index
    %40 = vector.load %arg1[%c0_19, %c4] : memref<128x5xi32, #tpu.memory_space<vmem>>, vector<128x1xi32>
    %41 = vector.broadcast %40 : vector<128x1xi32> to vector<128x32xi32>
    %42 = arith.cmpi eq, %41, %0 : vector<128x32xi32>
    %43 = arith.extui %42 : vector<128x32xi1> to vector<128x32xi32>
    %44 = arith.sitofp %43 : vector<128x32xi32> to vector<128x32xf32>
    %45 = arith.truncf %44 : vector<128x32xf32> to vector<128x32xbf16>
    %c4_20 = arith.constant 4 : index
    %c0_21 = arith.constant 0 : index
    %c0_22 = arith.constant 0 : index
    %46 = vector.load %arg2[%c4_20, %c0_21, %c0_22] : memref<5x32x128xbf16, #tpu.memory_space<vmem>>, vector<1x32x128xbf16>
    %47 = vector.shape_cast %46 : vector<1x32x128xbf16> to vector<32x128xbf16>
    %cst_23 = arith.constant dense<0.000000e+00> : vector<128x128xf32>
    %48 = tpu.matmul %45, %47, %cst_23 {dimension_numbers = #tpu.dot_dimension_numbers<[1], [0], [0], [1], [0, 0, 1, 1], [], []>} : vector<128x32xbf16>, vector<32x128xbf16>, vector<128x128xf32> -> vector<128x128xf32>
    %49 = arith.addf %39, %48 : vector<128x128xf32>
    %50 = vector.shape_cast %49 : vector<128x128xf32> to vector<8x16x128xf32>
    %c0_24 = arith.constant 0 : index
    %c0_25 = arith.constant 0 : index
    %51 = vector.load %arg4[%c0_24, %c0_25] : memref<16x128xf32, #tpu.memory_space<vmem>>, vector<16x128xf32>
    %52 = vector.shape_cast %51 : vector<16x128xf32> to vector<1x16x128xf32>
    %53 = vector.broadcast %52 : vector<1x16x128xf32> to vector<8x16x128xf32>
    %54 = arith.addf %50, %53 : vector<8x16x128xf32>
    %cst_26 = arith.constant dense<0xFF800000> : vector<8x128xf32>
    %55 = vector.multi_reduction <maximumf>, %54, %cst_26 [1] : vector<8x16x128xf32> to vector<8x128xf32>
    %c0_27 = arith.constant 0 : index
    %c0_28 = arith.constant 0 : index
    %56 = vector.load %arg3[%c0_27, %c0_28] : memref<1x128xf32, #tpu.memory_space<vmem>>, vector<1x128xf32>
    %57 = vector.broadcast %56 : vector<1x128xf32> to vector<8x128xf32>
    %58 = arith.addf %55, %57 : vector<8x128xf32>
    %cst_29 = arith.constant 0.000000e+00 : f32
    %59 = vector.broadcast %cst_29 : f32 to vector<8x128xf32>
    %60 = arith.maximumf %58, %59 : vector<8x128xf32>
    %61 = arith.truncf %60 : vector<8x128xf32> to vector<8x128xbf16>
    %c0_30 = arith.constant 0 : index
    %c0_31 = arith.constant 0 : index
    %62 = vector.load %arg5[%c0_30, %c0_31] : memref<128x128xbf16, #tpu.memory_space<vmem>>, vector<128x128xbf16>
    %cst_32 = arith.constant dense<0.000000e+00> : vector<8x128xf32>
    %63 = tpu.matmul %61, %62, %cst_32 {dimension_numbers = #tpu.dot_dimension_numbers<[1], [0], [0], [1], [0, 0, 1, 1], [], []>} : vector<8x128xbf16>, vector<128x128xbf16>, vector<8x128xf32> -> vector<8x128xf32>
    %c0_33 = arith.constant 0 : index
    %c0_34 = arith.constant 0 : index
    %64 = vector.load %arg6[%c0_33, %c0_34] : memref<1x128xf32, #tpu.memory_space<vmem>>, vector<1x128xf32>
    %65 = vector.broadcast %64 : vector<1x128xf32> to vector<8x128xf32>
    %66 = arith.addf %63, %65 : vector<8x128xf32>
    %cst_35 = arith.constant 0.000000e+00 : f32
    %67 = vector.broadcast %cst_35 : f32 to vector<8x128xf32>
    %68 = arith.maximumf %66, %67 : vector<8x128xf32>
    %69 = arith.truncf %68 : vector<8x128xf32> to vector<8x128xbf16>
    %c0_36 = arith.constant 0 : index
    %c0_37 = arith.constant 0 : index
    %70 = vector.load %arg7[%c0_36, %c0_37] : memref<128x128xbf16, #tpu.memory_space<vmem>>, vector<128x128xbf16>
    %cst_38 = arith.constant dense<0.000000e+00> : vector<8x128xf32>
    %71 = tpu.matmul %69, %70, %cst_38 {dimension_numbers = #tpu.dot_dimension_numbers<[1], [0], [0], [1], [0, 0, 1, 1], [], []>} : vector<8x128xbf16>, vector<128x128xbf16>, vector<8x128xf32> -> vector<8x128xf32>
    %c0_39 = arith.constant 0 : index
    %c0_40 = arith.constant 0 : index
    %72 = vector.load %arg8[%c0_39, %c0_40] : memref<1x128xf32, #tpu.memory_space<vmem>>, vector<1x128xf32>
    %73 = vector.broadcast %72 : vector<1x128xf32> to vector<8x128xf32>
    %74 = arith.addf %71, %73 : vector<8x128xf32>
    %75 = arith.negf %74 : vector<8x128xf32>
    %76 = math.exp %75 : vector<8x128xf32>
    %cst_41 = arith.constant 1.000000e+00 : f32
    %77 = vector.broadcast %cst_41 : f32 to vector<8x128xf32>
    %78 = arith.addf %77, %76 : vector<8x128xf32>
    %79 = arith.divf %77, %78 : vector<8x128xf32>
    %c0_42 = arith.constant 0 : index
    %c0_43 = arith.constant 0 : index
    %80 = vector.load %arg9[%c0_42, %c0_43] : memref<8x128xf32, #tpu.memory_space<vmem>>, vector<8x128xf32>
    tpu.vector_store %arg9[%c0_42, %c0_43], %79 {strides = array<i32>} : memref<8x128xf32, #tpu.memory_space<vmem>>, vector<8x128xf32>,
    return
  }
  func.func @transform_0(%arg0: i32) -> (i32, i32) {
    %c0_i32 = arith.constant 0 : i32
    %c0_i32_0 = arith.constant 0 : i32
    return %arg0, %c0_i32 : i32, i32
  }
  func.func @transform_1(%arg0: i32) -> (i32, i32, i32) {
    %c0_i32 = arith.constant 0 : i32
    %c0_i32_0 = arith.constant 0 : i32
    %c0_i32_1 = arith.constant 0 : i32
    %c0_i32_2 = arith.constant 0 : i32
    return %c0_i32, %c0_i32_0, %c0_i32_1 : i32, i32, i32
  }
  func.func @transform_2(%arg0: i32) -> (i32, i32) {
    %c0_i32 = arith.constant 0 : i32
    %c0_i32_0 = arith.constant 0 : i32
    %c0_i32_1 = arith.constant 0 : i32
    return %c0_i32, %c0_i32_0 : i32, i32
  }
  func.func @transform_3(%arg0: i32) -> (i32, i32) {
    %c0_i32 = arith.constant 0 : i32
    %c0_i32_0 = arith.constant 0 : i32
    %c0_i32_1 = arith.constant 0 : i32
    return %c0_i32, %c0_i32_0 : i32, i32
  }
  func.func @transform_4(%arg0: i32) -> (i32, i32) {
    %c0_i32 = arith.constant 0 : i32
    %c0_i32_0 = arith.constant 0 : i32
    %c0_i32_1 = arith.constant 0 : i32
    return %c0_i32, %c0_i32_0 : i32, i32
  }
  func.func @transform_5(%arg0: i32) -> (i32, i32) {
    %c0_i32 = arith.constant 0 : i32
    %c0_i32_0 = arith.constant 0 : i32
    %c0_i32_1 = arith.constant 0 : i32
    return %c0_i32, %c0_i32_0 : i32, i32
  }
  func.func @transform_6(%arg0: i32) -> (i32, i32) {
    %c0_i32 = arith.constant 0 : i32
    %c0_i32_0 = arith.constant 0 : i32
    %c0_i32_1 = arith.constant 0 : i32
    return %c0_i32, %c0_i32_0 : i32, i32
  }
  func.func @transform_7(%arg0: i32) -> (i32, i32) {
    %c0_i32 = arith.constant 0 : i32
    %c0_i32_0 = arith.constant 0 : i32
    %c0_i32_1 = arith.constant 0 : i32
    return %c0_i32, %c0_i32_0 : i32, i32
  }
  func.func @transform_8(%arg0: i32) -> (i32, i32) {
    %c0_i32 = arith.constant 0 : i32
    %c0_i32_0 = arith.constant 0 : i32
    return %arg0, %c0_i32 : i32, i32
  }
}

</mosaic_0001>

<llo_original>
// kernel: tpu_custom_call.1
$region0: #{tpu_custom_call.1}
  #allocation0 [shape = 'u32[]', space=smem, size = 0x4, offset = 0x4, fixed_abs, tag = 'smem constant byte address 0x4 - core index']
  #allocation1 [shape = 'u32[144,128]{1,0:T(1,128)}', space=vmem, size = 0x12000, scoped, tag = 'internal scratch']
  %s0 = inlined_call_operand.vmem [shape: s32[128,5], index: 0, kind: input, shape index: {}]
  %s1 = inlined_call_operand.vmem [shape: bf16[5,32,128], index: 1, kind: input, shape index: {}]
  %s2 = inlined_call_operand.vmem [shape: f32[1,128], index: 2, kind: input, shape index: {}]
  %s3 = inlined_call_operand.hbm [shape: f32[16,128], index: 3, kind: input, shape index: {}]
  %s4 = inlined_call_operand.vmem [shape: bf16[128,128], index: 4, kind: input, shape index: {}]
  %s5 = inlined_call_operand.vmem [shape: f32[1,128], index: 5, kind: input, shape index: {}]
  %s6 = inlined_call_operand.hbm [shape: bf16[128,128], index: 6, kind: input, shape index: {}]
  %s7 = inlined_call_operand.vmem [shape: f32[1,128], index: 7, kind: input, shape index: {}]
  %s8 = inlined_call_operand.hbm [shape: f32[8,128], index: 8, kind: output, shape index: {}]
  %s9 = sld [smem:[#allocation0]]
  $region50: #{tpu_custom_call.1} parent=0
    _
  %s11 = ssub.s32 1, %s9
  %s12 = scalar_select 0, %s11, %s9
  $region1: #{tpu_custom_call.1} parent=0
    #allocation2 [shape = 'u8[8192]{0}', space=vmem, size = 0x2000, scoped, tag = 'input window, operand 3, single buffered']
    #allocation3 [shape = 's32[1]{0}', space=sflag, size = 0x4, scoped, tag = 'scoped memory for tpu_custom_call.1']
    #allocation4 [shape = 's32[1]{0}', space=sflag, size = 0x4, scoped, tag = 'scoped memory for tpu_custom_call.1']
    #allocation5 [shape = 'u8[32768]{0}', space=vmem, size = 0x8000, scoped, tag = 'input window, operand 6, single buffered']
    #allocation6 [shape = 's32[1]{0}', space=sflag, size = 0x4, scoped, tag = 'scoped memory for tpu_custom_call.1']
    #allocation7 [shape = 'u8[4096]{0}', space=vmem, size = 0x1000, scoped, tag = 'output window, operand 0, single buffered']
    %13 = vsyncpa [#allocation3], 0
    %14 = vsyncpa [#allocation6], 0
    %15 = vsyncpa [#allocation4], 0
    // Predicated region
    $region2: #{tpu_custom_call.1} parent=1 // pred_check
      _
    $region3: #{tpu_custom_call.1} parent=1 // pred_check_branch
      %17 = sbr.rel (0) target = $region5
    $region4: #{tpu_custom_call.1} parent=1 // pred_region
      _
    $region5: #{tpu_custom_call.1} parent=1 // pred_fallthru
      _
    // Predicated region
    $region6: #{tpu_custom_call.1} parent=1 // pred_check
      _
    $region7: #{tpu_custom_call.1} parent=1 // pred_check_branch
      %19 = sbr.rel (0) target = $region9
    $region8: #{tpu_custom_call.1} parent=1 // pred_region
      _
    $region9: #{tpu_custom_call.1} parent=1 // pred_fallthru
      _
    // Predicated region
    $region10: #{tpu_custom_call.1} parent=1 // pred_check
      _
    $region11: #{tpu_custom_call.1} parent=1 // pred_check_branch
      %21 = sbr.rel (0) target = $region13
    $region12: #{tpu_custom_call.1} parent=1 // pred_region
      _
    $region13: #{tpu_custom_call.1} parent=1 // pred_fallthru
      _
    // Predicated region
    $region14: #{tpu_custom_call.1} parent=1 // pred_check
      _
    $region15: #{tpu_custom_call.1} parent=1 // pred_check_branch
      %23 = sbr.rel (0) target = $region17
    $region16: #{tpu_custom_call.1} parent=1 // pred_region
      %s25 = ssub.s32 256, 256
      %26 = vsyncadd [#allocation3], %s25
      %s27 = sshll.u32 [#allocation2], 4
      %s28 = int_to_ptr.vmem [resolvable:$true] %s27
      %33 = dma.hbm_to_vmem [thread:$0]  %s3, 256, %s28, [#allocation3], 128, 128, 8
    $region17: #{tpu_custom_call.1} parent=1 // pred_fallthru
      _
    // Predicated region
    $region18: #{tpu_custom_call.1} parent=1 // pred_check
      _
    $region19: #{tpu_custom_call.1} parent=1 // pred_check_branch
      %35 = sbr.rel (0) target = $region21
    $region20: #{tpu_custom_call.1} parent=1 // pred_region
      _
    $region21: #{tpu_custom_call.1} parent=1 // pred_fallthru
      _
    // Predicated region
    $region22: #{tpu_custom_call.1} parent=1 // pred_check
      _
    $region23: #{tpu_custom_call.1} parent=1 // pred_check_branch
      %37 = sbr.rel (0) target = $region25
    $region24: #{tpu_custom_call.1} parent=1 // pred_region
      _
    $region25: #{tpu_custom_call.1} parent=1 // pred_fallthru
      _
    // Predicated region
    $region26: #{tpu_custom_call.1} parent=1 // pred_check
      _
    $region27: #{tpu_custom_call.1} parent=1 // pred_check_branch
      %39 = sbr.rel (0) target = $region29
    $region28: #{tpu_custom_call.1} parent=1 // pred_region
      %s41 = ssub.s32 1024, 1024
      %42 = vsyncadd [#allocation6], %s41
      %s43 = sshll.u32 [#allocation5], 4
      %s44 = int_to_ptr.vmem [resolvable:$true] %s43
      %49 = dma.hbm_to_vmem [thread:$0]  %s6, 1024, %s44, [#allocation6], 64, 64, 4
    $region29: #{tpu_custom_call.1} parent=1 // pred_fallthru
      _
    // Predicated region
    $region30: #{tpu_custom_call.1} parent=1 // pred_check
      _
    $region31: #{tpu_custom_call.1} parent=1 // pred_check_branch
      %51 = sbr.rel (0) target = $region33
    $region32: #{tpu_custom_call.1} parent=1 // pred_region
      _
    $region33: #{tpu_custom_call.1} parent=1 // pred_fallthru
      _
    // Predicated region
    $region34: #{tpu_custom_call.1} parent=1 // pred_check
      _
    $region35: #{tpu_custom_call.1} parent=1 // pred_check_branch
      %53 = sbr.rel (0) target = $region37
    $region36: #{tpu_custom_call.1} parent=1 // pred_region
      %54 = dma.done [#allocation3], 256
    $region37: #{tpu_custom_call.1} parent=1 // pred_fallthru
      _
    // Predicated region
    $region38: #{tpu_custom_call.1} parent=1 // pred_check
      _
    $region39: #{tpu_custom_call.1} parent=1 // pred_check_branch
      %56 = sbr.rel (0) target = $region41
    $region40: #{tpu_custom_call.1} parent=1 // pred_region
      %57 = dma.done [#allocation6], 1024
    $region41: #{tpu_custom_call.1} parent=1 // pred_fallthru
      _
    %v59 = vlaneseq
    %v60 = vand.u32 %v59, 127
    %v61 = vld [vmem:[%s0] sm:$0xff]
    %v62 = vld [vmem:[%s0 + $0x8] sm:$0xff]
    %v63 = vld [vmem:[%s0 + $0x10] sm:$0xff]
    %v64 = vld [vmem:[%s0 + $0x18] sm:$0xff]
    %v65 = vld [vmem:[%s0 + $0x20] sm:$0xff]
    %v66 = vld [vmem:[%s0 + $0x28] sm:$0xff]
    %v67 = vld [vmem:[%s0 + $0x30] sm:$0xff]
    %v68 = vld [vmem:[%s0 + $0x38] sm:$0xff]
    %v69 = vld [vmem:[%s0 + $0x40] sm:$0xff]
    %v70 = vld [vmem:[%s0 + $0x48] sm:$0xff]
    %v71 = vld [vmem:[%s0 + $0x50] sm:$0xff]
    %v72 = vld [vmem:[%s0 + $0x58] sm:$0xff]
    %v73 = vld [vmem:[%s0 + $0x60] sm:$0xff]
    %v74 = vld [vmem:[%s0 + $0x68] sm:$0xff]
    %v75 = vld [vmem:[%s0 + $0x70] sm:$0xff]
    %v76 = vld [vmem:[%s0 + $0x78] sm:$0xff]
    %77 = vset.pattern.permute.xlu0 0
    %78 = vperm.xlu0 %77, %v61
    %v79 = vpop.permute.xlu0 %78
    %80 = vset.pattern.permute.xlu0 0
    %81 = vperm.xlu0 %80, %v62
    %v82 = vpop.permute.xlu0 %81
    %83 = vset.pattern.permute.xlu0 0
    %84 = vperm.xlu0 %83, %v63
    %v85 = vpop.permute.xlu0 %84
    %86 = vset.pattern.permute.xlu0 0
    %87 = vperm.xlu0 %86, %v64
    %v88 = vpop.permute.xlu0 %87
    %89 = vset.pattern.permute.xlu0 0
    %90 = vperm.xlu0 %89, %v65
    %v91 = vpop.permute.xlu0 %90
    %92 = vset.pattern.permute.xlu0 0
    %93 = vperm.xlu0 %92, %v66
    %v94 = vpop.permute.xlu0 %93
    %95 = vset.pattern.permute.xlu0 0
    %96 = vperm.xlu0 %95, %v67
    %v97 = vpop.permute.xlu0 %96
    %98 = vset.pattern.permute.xlu0 0
    %99 = vperm.xlu0 %98, %v68
    %v100 = vpop.permute.xlu0 %99
    %101 = vset.pattern.permute.xlu0 0
    %102 = vperm.xlu0 %101, %v69
    %v103 = vpop.permute.xlu0 %102
    %104 = vset.pattern.permute.xlu0 0
    %105 = vperm.xlu0 %104, %v70
    %v106 = vpop.permute.xlu0 %105
    %107 = vset.pattern.permute.xlu0 0
    %108 = vperm.xlu0 %107, %v71
    %v109 = vpop.permute.xlu0 %108
    %110 = vset.pattern.permute.xlu0 0
    %111 = vperm.xlu0 %110, %v72
    %v112 = vpop.permute.xlu0 %111
    %113 = vset.pattern.permute.xlu0 0
    %114 = vperm.xlu0 %113, %v73
    %v115 = vpop.permute.xlu0 %114
    %116 = vset.pattern.permute.xlu0 0
    %117 = vperm.xlu0 %116, %v74
    %v118 = vpop.permute.xlu0 %117
    %119 = vset.pattern.permute.xlu0 0
    %120 = vperm.xlu0 %119, %v75
    %v121 = vpop.permute.xlu0 %120
    %122 = vset.pattern.permute.xlu0 0
    %123 = vperm.xlu0 %122, %v76
    %v124 = vpop.permute.xlu0 %123
    %vm125 = vcmp.eq.s32.totalorder %v79, %v60
    %vm126 = vcmp.eq.s32.totalorder %v82, %v60
    %vm127 = vcmp.eq.s32.totalorder %v85, %v60
    %vm128 = vcmp.eq.s32.totalorder %v88, %v60
    %vm129 = vcmp.eq.s32.totalorder %v91, %v60
    %vm130 = vcmp.eq.s32.totalorder %v94, %v60
    %vm131 = vcmp.eq.s32.totalorder %v97, %v60
    %vm132 = vcmp.eq.s32.totalorder %v100, %v60
    %vm133 = vcmp.eq.s32.totalorder %v103, %v60
    %vm134 = vcmp.eq.s32.totalorder %v106, %v60
    %vm135 = vcmp.eq.s32.totalorder %v109, %v60
    %vm136 = vcmp.eq.s32.totalorder %v112, %v60
    %vm137 = vcmp.eq.s32.totalorder %v115, %v60
    %vm138 = vcmp.eq.s32.totalorder %v118, %v60
    %vm139 = vcmp.eq.s32.totalorder %v121, %v60
    %vm140 = vcmp.eq.s32.totalorder %v124, %v60
    %v141 = vsel %vm125, 1, 0
    %v142 = vsel %vm126, 1, 0
    %v143 = vsel %vm127, 1, 0
    %v144 = vsel %vm128, 1, 0
    %v145 = vsel %vm129, 1, 0
    %v146 = vsel %vm130, 1, 0
    %v147 = vsel %vm131, 1, 0
    %v148 = vsel %vm132, 1, 0
    %v149 = vsel %vm133, 1, 0
    %v150 = vsel %vm134, 1, 0
    %v151 = vsel %vm135, 1, 0
    %v152 = vsel %vm136, 1, 0
    %v153 = vsel %vm137, 1, 0
    %v154 = vsel %vm138, 1, 0
    %v155 = vsel %vm139, 1, 0
    %v156 = vsel %vm140, 1, 0
    %v157 = vcvt.s32.f32 %v141
    %v158 = vcvt.s32.f32 %v142
    %v159 = vcvt.s32.f32 %v143
    %v160 = vcvt.s32.f32 %v144
    %v161 = vcvt.s32.f32 %v145
    %v162 = vcvt.s32.f32 %v146
    %v163 = vcvt.s32.f32 %v147
    %v164 = vcvt.s32.f32 %v148
    %v165 = vcvt.s32.f32 %v149
    %v166 = vcvt.s32.f32 %v150
    %v167 = vcvt.s32.f32 %v151
    %v168 = vcvt.s32.f32 %v152
    %v169 = vcvt.s32.f32 %v153
    %v170 = vcvt.s32.f32 %v154
    %v171 = vcvt.s32.f32 %v155
    %v172 = vcvt.s32.f32 %v156
    %v173 = vpack.c.bf16 %v158, %v157
    %v174 = vpack.c.bf16 %v160, %v159
    %v175 = vpack.c.bf16 %v162, %v161
    %v176 = vpack.c.bf16 %v164, %v163
    %v177 = vpack.c.bf16 %v166, %v165
    %v178 = vpack.c.bf16 %v168, %v167
    %v179 = vpack.c.bf16 %v170, %v169
    %v180 = vpack.c.bf16 %v172, %v171
    %v181 = vld [vmem:[%s1] sm:$0xf]
    %v182 = vld [vmem:[%s1 + $0x4] sm:$0xf]
    %v183 = vld [vmem:[%s1 + $0x8] sm:$0xf]
    %v184 = vld [vmem:[%s1 + $0xc] sm:$0xf]
    %185 = vset.pattern.permute.xlu0 1
    %186 = vperm.xlu0 %185, %v61
    %v187 = vpop.permute.xlu0 %186
    %188 = vset.pattern.permute.xlu0 1
    %189 = vperm.xlu0 %188, %v62
    %v190 = vpop.permute.xlu0 %189
    %191 = vset.pattern.permute.xlu0 1
    %192 = vperm.xlu0 %191, %v63
    %v193 = vpop.permute.xlu0 %192
    %194 = vset.pattern.permute.xlu0 1
    %195 = vperm.xlu0 %194, %v64
    %v196 = vpop.permute.xlu0 %195
    %197 = vset.pattern.permute.xlu0 1
    %198 = vperm.xlu0 %197, %v65
    %v199 = vpop.permute.xlu0 %198
    %200 = vset.pattern.permute.xlu0 1
    %201 = vperm.xlu0 %200, %v66
    %v202 = vpop.permute.xlu0 %201
    %203 = vset.pattern.permute.xlu0 1
    %204 = vperm.xlu0 %203, %v67
    %v205 = vpop.permute.xlu0 %204
    %206 = vset.pattern.permute.xlu0 1
    %207 = vperm.xlu0 %206, %v68
    %v208 = vpop.permute.xlu0 %207
    %209 = vset.pattern.permute.xlu0 1
    %210 = vperm.xlu0 %209, %v69
    %v211 = vpop.permute.xlu0 %210
    %212 = vset.pattern.permute.xlu0 1
    %213 = vperm.xlu0 %212, %v70
    %v214 = vpop.permute.xlu0 %213
    %215 = vset.pattern.permute.xlu0 1
    %216 = vperm.xlu0 %215, %v71
    %v217 = vpop.permute.xlu0 %216
    %218 = vset.pattern.permute.xlu0 1
    %219 = vperm.xlu0 %218, %v72
    %v220 = vpop.permute.xlu0 %219
    %221 = vset.pattern.permute.xlu0 1
    %222 = vperm.xlu0 %221, %v73
    %v223 = vpop.permute.xlu0 %222
    %224 = vset.pattern.permute.xlu0 1
    %225 = vperm.xlu0 %224, %v74
    %v226 = vpop.permute.xlu0 %225
    %227 = vset.pattern.permute.xlu0 1
    %228 = vperm.xlu0 %227, %v75
    %v229 = vpop.permute.xlu0 %228
    %230 = vset.pattern.permute.xlu0 1
    %231 = vperm.xlu0 %230, %v76
    %v232 = vpop.permute.xlu0 %231
    %vm233 = vcmp.eq.s32.totalorder %v187, %v60
    %vm234 = vcmp.eq.s32.totalorder %v190, %v60
    %vm235 = vcmp.eq.s32.totalorder %v193, %v60
    %vm236 = vcmp.eq.s32.totalorder %v196, %v60
    %vm237 = vcmp.eq.s32.totalorder %v199, %v60
    %vm238 = vcmp.eq.s32.totalorder %v202, %v60
    %vm239 = vcmp.eq.s32.totalorder %v205, %v60
    %vm240 = vcmp.eq.s32.totalorder %v208, %v60
    %vm241 = vcmp.eq.s32.totalorder %v211, %v60
    %vm242 = vcmp.eq.s32.totalorder %v214, %v60
    %vm243 = vcmp.eq.s32.totalorder %v217, %v60
    %vm244 = vcmp.eq.s32.totalorder %v220, %v60
    %vm245 = vcmp.eq.s32.totalorder %v223, %v60
    %vm246 = vcmp.eq.s32.totalorder %v226, %v60
    %vm247 = vcmp.eq.s32.totalorder %v229, %v60
    %vm248 = vcmp.eq.s32.totalorder %v232, %v60
    %v249 = vsel %vm233, 1, 0
    %v250 = vsel %vm234, 1, 0
    %v251 = vsel %vm235, 1, 0
    %v252 = vsel %vm236, 1, 0
    %v253 = vsel %vm237, 1, 0
    %v254 = vsel %vm238, 1, 0
    %v255 = vsel %vm239, 1, 0
    %v256 = vsel %vm240, 1, 0
    %v257 = vsel %vm241, 1, 0
    %v258 = vsel %vm242, 1, 0
    %v259 = vsel %vm243, 1, 0
    %v260 = vsel %vm244, 1, 0
    %v261 = vsel %vm245, 1, 0
    %v262 = vsel %vm246, 1, 0
    %v263 = vsel %vm247, 1, 0
    %v264 = vsel %vm248, 1, 0
    %v265 = vcvt.s32.f32 %v249
    %v266 = vcvt.s32.f32 %v250
    %v267 = vcvt.s32.f32 %v251
    %v268 = vcvt.s32.f32 %v252
    %v269 = vcvt.s32.f32 %v253
    %v270 = vcvt.s32.f32 %v254
    %v271 = vcvt.s32.f32 %v255
    %v272 = vcvt.s32.f32 %v256
    %v273 = vcvt.s32.f32 %v257
    %v274 = vcvt.s32.f32 %v258
    %v275 = vcvt.s32.f32 %v259
    %v276 = vcvt.s32.f32 %v260
    %v277 = vcvt.s32.f32 %v261
    %v278 = vcvt.s32.f32 %v262
    %v279 = vcvt.s32.f32 %v263
    %v280 = vcvt.s32.f32 %v264
    %v281 = vpack.c.bf16 %v266, %v265
    %v282 = vpack.c.bf16 %v268, %v267
    %v283 = vpack.c.bf16 %v270, %v269
    %v284 = vpack.c.bf16 %v272, %v271
    %v285 = vpack.c.bf16 %v274, %v273
    %v286 = vpack.c.bf16 %v276, %v275
    %v287 = vpack.c.bf16 %v278, %v277
    %v288 = vpack.c.bf16 %v280, %v279
    %s289 = scalar_lea.vmem %s1, 16
    %v290 = vld [vmem:[%s289] sm:$0xf]
    %v291 = vld [vmem:[%s289 + $0x4] sm:$0xf]
    %v292 = vld [vmem:[%s289 + $0x8] sm:$0xf]
    %v293 = vld [vmem:[%s289 + $0xc] sm:$0xf]
    %v298 = vunpack.c.l.b16 %v290
    %v299 = vunpack.c.l.b16 %v291
    %v300 = vunpack.c.l.b16 %v292
    %v301 = vunpack.c.l.b16 %v293
    %v302 = vpack.c.b16 %v299, %v298
    %v303 = vpack.c.b16 %v301, %v300
    %vm306 = vcmask 261120
    %v308 = vsel %vm306, %v281, 0
    %v311 = vsel %vm306, %v282, 0
    %v314 = vsel %vm306, %v283, 0
    %v317 = vsel %vm306, %v284, 0
    %v320 = vsel %vm306, %v285, 0
    %v323 = vsel %vm306, %v286, 0
    %v326 = vsel %vm306, %v287, 0
    %v329 = vsel %vm306, %v288, 0
    %331 = vmatprep.subr.bf16.mxu0 0
    %332 = vmatpush1.bf16.msra.mxu0 %v302
    %333 = vmatprep.subr.bf16.mxu0 0
    %334 = vmatpush1.bf16.msra.mxu0 %v303
    %335 = vmatprep.subr.bf16.mxu0 0
    %336 = vmatpush1.bf16.msra.mxu0 0
    %337 = vmatprep.subr.bf16.mxu0 0
    %338 = vmatpush1.bf16.msra.mxu0 0
    %339 = vmatprep.subr.bf16.mxu0 0
    %340 = vmatpush1.bf16.msra.mxu0 0
    %341 = vmatprep.subr.bf16.mxu0 0
    %342 = vmatpush1.bf16.msra.mxu0 0
    %343 = vmatprep.subr.bf16.mxu0 0
    %344 = vmatpush1.bf16.msra.mxu0 0
    %345 = vmatprep.subr.bf16.mxu0 0
    %346 = vmatpush1.bf16.msra.mxu0 0
    %347 = vmatprep.subr.bf16.mxu0 0
    %348 = vmatpush1.bf16.msra.mxu0 0
    %349 = vmatprep.subr.bf16.mxu0 0
    %350 = vmatpush1.bf16.msra.mxu0 0
    %351 = vmatprep.subr.bf16.mxu0 0
    %352 = vmatpush1.bf16.msra.mxu0 0
    %353 = vmatprep.subr.bf16.mxu0 0
    %354 = vmatpush1.bf16.msra.mxu0 0
    %355 = vmatprep.subr.bf16.mxu0 0
    %356 = vmatpush1.bf16.msra.mxu0 0
    %357 = vmatprep.subr.bf16.mxu0 0
    %358 = vmatpush1.bf16.msra.mxu0 0
    %359 = vmatprep.subr.bf16.mxu0 0
    %360 = vmatpush1.bf16.msra.mxu0 0
    %361 = vmatprep.subr.bf16.mxu0 0
    %362 = vmatpush1.bf16.msra.mxu0 0
    %363 = vmatprep.mubr.bf16.mxu0 0
    %364 = vmatmul.mubr.bf16.gmra.mrb[0].mxu0 %v308
    %v365 = vpop.f32.mrb[0].mxu0
    %v366 = vadd.f32 0.0, %v365
    %v367 = vpop.f32.mrb[0].mxu0
    %v368 = vpop.f32.mrb[0].mxu0
    %v369 = vadd.f32 0.0, %v368
    %v370 = vpop.f32.mrb[0].mxu0
    %371 = vmatprep.mubr.bf16.mxu0 0
    %372 = vmatmul.mubr.bf16.gmra.mrb[0].mxu0 %v311
    %v373 = vpop.f32.mrb[0].mxu0
    %v374 = vadd.f32 0.0, %v373
    %v375 = vpop.f32.mrb[0].mxu0
    %v376 = vpop.f32.mrb[0].mxu0
    %v377 = vadd.f32 0.0, %v376
    %v378 = vpop.f32.mrb[0].mxu0
    %379 = vmatprep.mubr.bf16.mxu0 0
    %380 = vmatmul.mubr.bf16.gmra.mrb[0].mxu0 %v314
    %v381 = vpop.f32.mrb[0].mxu0
    %v382 = vadd.f32 0.0, %v381
    %v383 = vpop.f32.mrb[0].mxu0
    %v384 = vpop.f32.mrb[0].mxu0
    %v385 = vadd.f32 0.0, %v384
    %v386 = vpop.f32.mrb[0].mxu0
    %387 = vmatprep.mubr.bf16.mxu0 0
    %388 = vmatmul.mubr.bf16.gmra.mrb[0].mxu0 %v317
    %v389 = vpop.f32.mrb[0].mxu0
    %v390 = vadd.f32 0.0, %v389
    %v391 = vpop.f32.mrb[0].mxu0
    %v392 = vpop.f32.mrb[0].mxu0
    %v393 = vadd.f32 0.0, %v392
    %v394 = vpop.f32.mrb[0].mxu0
    %395 = vmatprep.mubr.bf16.mxu0 0
    %396 = vmatmul.mubr.bf16.gmra.mrb[0].mxu0 %v320
    %v397 = vpop.f32.mrb[0].mxu0
    %v398 = vadd.f32 0.0, %v397
    %v399 = vpop.f32.mrb[0].mxu0
    %v400 = vpop.f32.mrb[0].mxu0
    %v401 = vadd.f32 0.0, %v400
    %v402 = vpop.f32.mrb[0].mxu0
    %403 = vmatprep.mubr.bf16.mxu0 0
    %404 = vmatmul.mubr.bf16.gmra.mrb[0].mxu0 %v323
    %v405 = vpop.f32.mrb[0].mxu0
    %v406 = vadd.f32 0.0, %v405
    %v407 = vpop.f32.mrb[0].mxu0
    %v408 = vpop.f32.mrb[0].mxu0
    %v409 = vadd.f32 0.0, %v408
    %v410 = vpop.f32.mrb[0].mxu0
    %411 = vmatprep.mubr.bf16.mxu0 0
    %412 = vmatmul.mubr.bf16.gmra.mrb[0].mxu0 %v326
    %v413 = vpop.f32.mrb[0].mxu0
    %v414 = vadd.f32 0.0, %v413
    %v415 = vpop.f32.mrb[0].mxu0
    %v416 = vpop.f32.mrb[0].mxu0
    %v417 = vadd.f32 0.0, %v416
    %v418 = vpop.f32.mrb[0].mxu0
    %419 = vmatprep.mubr.bf16.mxu0 0
    %420 = vmatmul.mubr.bf16.gmra.mrb[0].mxu0 %v329
    %v421 = vpop.f32.mrb[0].mxu0
    %v422 = vadd.f32 0.0, %v421
    %v423 = vpop.f32.mrb[0].mxu0
    %v424 = vpop.f32.mrb[0].mxu0
    %v425 = vadd.f32 0.0, %v424
    %v426 = vpop.f32.mrb[0].mxu0
    %427 = vdwg.mxu0
    %v432 = vunpack.c.l.b16 %v181
    %v433 = vunpack.c.l.b16 %v182
    %v434 = vunpack.c.l.b16 %v183
    %v435 = vunpack.c.l.b16 %v184
    %v436 = vpack.c.b16 %v433, %v432
    %v437 = vpack.c.b16 %v435, %v434
    %v441 = vsel %vm306, %v173, 0
    %v444 = vsel %vm306, %v174, 0
    %v447 = vsel %vm306, %v175, 0
    %v450 = vsel %vm306, %v176, 0
    %v453 = vsel %vm306, %v177, 0
    %v456 = vsel %vm306, %v178, 0
    %v459 = vsel %vm306, %v179, 0
    %v462 = vsel %vm306, %v180, 0
    %464 = vmatprep.subr.bf16.mxu0 0
    %465 = vmatpush1.bf16.msra.mxu0 %v436
    %466 = vmatprep.subr.bf16.mxu0 0
    %467 = vmatpush1.bf16.msra.mxu0 %v437
    %468 = vmatprep.subr.bf16.mxu0 0
    %469 = vmatpush1.bf16.msra.mxu0 0
    %470 = vmatprep.subr.bf16.mxu0 0
    %471 = vmatpush1.bf16.msra.mxu0 0
    %472 = vmatprep.subr.bf16.mxu0 0
    %473 = vmatpush1.bf16.msra.mxu0 0
    %474 = vmatprep.subr.bf16.mxu0 0
    %475 = vmatpush1.bf16.msra.mxu0 0
    %476 = vmatprep.subr.bf16.mxu0 0
    %477 = vmatpush1.bf16.msra.mxu0 0
    %478 = vmatprep.subr.bf16.mxu0 0
    %479 = vmatpush1.bf16.msra.mxu0 0
    %480 = vmatprep.subr.bf16.mxu0 0
    %481 = vmatpush1.bf16.msra.mxu0 0
    %482 = vmatprep.subr.bf16.mxu0 0
    %483 = vmatpush1.bf16.msra.mxu0 0
    %484 = vmatprep.subr.bf16.mxu0 0
    %485 = vmatpush1.bf16.msra.mxu0 0
    %486 = vmatprep.subr.bf16.mxu0 0
    %487 = vmatpush1.bf16.msra.mxu0 0
    %488 = vmatprep.subr.bf16.mxu0 0
    %489 = vmatpush1.bf16.msra.mxu0 0
    %490 = vmatprep.subr.bf16.mxu0 0
    %491 = vmatpush1.bf16.msra.mxu0 0
    %492 = vmatprep.subr.bf16.mxu0 0
    %493 = vmatpush1.bf16.msra.mxu0 0
    %494 = vmatprep.subr.bf16.mxu0 0
    %495 = vmatpush1.bf16.msra.mxu0 0
    %496 = vmatprep.mubr.bf16.mxu0 0
    %497 = vmatmul.mubr.bf16.gmra.mrb[0].mxu0 %v441
    %v498 = vpop.f32.mrb[0].mxu0
    %v499 = vadd.f32 %v366, %v498
    %v500 = vpop.f32.mrb[0].mxu0
    %v501 = vpop.f32.mrb[0].mxu0
    %v502 = vadd.f32 %v369, %v501
    %v503 = vpop.f32.mrb[0].mxu0
    %504 = vmatprep.mubr.bf16.mxu0 0
    %505 = vmatmul.mubr.bf16.gmra.mrb[0].mxu0 %v444
    %v506 = vpop.f32.mrb[0].mxu0
    %v507 = vadd.f32 %v374, %v506
    %v508 = vpop.f32.mrb[0].mxu0
    %v509 = vpop.f32.mrb[0].mxu0
    %v510 = vadd.f32 %v377, %v509
    %v511 = vpop.f32.mrb[0].mxu0
    %512 = vmatprep.mubr.bf16.mxu0 0
    %513 = vmatmul.mubr.bf16.gmra.mrb[0].mxu0 %v447
    %v514 = vpop.f32.mrb[0].mxu0
    %v515 = vadd.f32 %v382, %v514
    %v516 = vpop.f32.mrb[0].mxu0
    %v517 = vpop.f32.mrb[0].mxu0
    %v518 = vadd.f32 %v385, %v517
    %v519 = vpop.f32.mrb[0].mxu0
    %520 = vmatprep.mubr.bf16.mxu0 0
    %521 = vmatmul.mubr.bf16.gmra.mrb[0].mxu0 %v450
    %v522 = vpop.f32.mrb[0].mxu0
    %v523 = vadd.f32 %v390, %v522
    %v524 = vpop.f32.mrb[0].mxu0
    %v525 = vpop.f32.mrb[0].mxu0
    %v526 = vadd.f32 %v393, %v525
    %v527 = vpop.f32.mrb[0].mxu0
    %528 = vmatprep.mubr.bf16.mxu0 0
    %529 = vmatmul.mubr.bf16.gmra.mrb[0].mxu0 %v453
    %v530 = vpop.f32.mrb[0].mxu0
    %v531 = vadd.f32 %v398, %v530
    %v532 = vpop.f32.mrb[0].mxu0
    %v533 = vpop.f32.mrb[0].mxu0
    %v534 = vadd.f32 %v401, %v533
    %v535 = vpop.f32.mrb[0].mxu0
    %536 = vmatprep.mubr.bf16.mxu0 0
    %537 = vmatmul.mubr.bf16.gmra.mrb[0].mxu0 %v456
    %v538 = vpop.f32.mrb[0].mxu0
    %v539 = vadd.f32 %v406, %v538
    %v540 = vpop.f32.mrb[0].mxu0
    %v541 = vpop.f32.mrb[0].mxu0
    %v542 = vadd.f32 %v409, %v541
    %v543 = vpop.f32.mrb[0].mxu0
    %544 = vmatprep.mubr.bf16.mxu0 0
    %545 = vmatmul.mubr.bf16.gmra.mrb[0].mxu0 %v459
    %v546 = vpop.f32.mrb[0].mxu0
    %v547 = vadd.f32 %v414, %v546
    %v548 = vpop.f32.mrb[0].mxu0
    %v549 = vpop.f32.mrb[0].mxu0
    %v550 = vadd.f32 %v417, %v549
    %v551 = vpop.f32.mrb[0].mxu0
    %552 = vmatprep.mubr.bf16.mxu0 0
    %553 = vmatmul.mubr.bf16.gmra.mrb[0].mxu0 %v462
    %v554 = vpop.f32.mrb[0].mxu0
    %v555 = vadd.f32 %v422, %v554
    %v556 = vpop.f32.mrb[0].mxu0
    %v557 = vpop.f32.mrb[0].mxu0
    %v558 = vadd.f32 %v425, %v557
    %v559 = vpop.f32.mrb[0].mxu0
    %560 = vdwg.mxu0
    %561 = vset.pattern.permute.xlu0 2
    %562 = vperm.xlu0 %561, %v61
    %v563 = vpop.permute.xlu0 %562
    %564 = vset.pattern.permute.xlu0 2
    %565 = vperm.xlu0 %564, %v62
    %v566 = vpop.permute.xlu0 %565
    %567 = vset.pattern.permute.xlu0 2
    %568 = vperm.xlu0 %567, %v63
    %v569 = vpop.permute.xlu0 %568
    %570 = vset.pattern.permute.xlu0 2
    %571 = vperm.xlu0 %570, %v64
    %v572 = vpop.permute.xlu0 %571
    %573 = vset.pattern.permute.xlu0 2
    %574 = vperm.xlu0 %573, %v65
    %v575 = vpop.permute.xlu0 %574
    %576 = vset.pattern.permute.xlu0 2
    %577 = vperm.xlu0 %576, %v66
    %v578 = vpop.permute.xlu0 %577
    %579 = vset.pattern.permute.xlu0 2
    %580 = vperm.xlu0 %579, %v67
    %v581 = vpop.permute.xlu0 %580
    %582 = vset.pattern.permute.xlu0 2
    %583 = vperm.xlu0 %582, %v68
    %v584 = vpop.permute.xlu0 %583
    %585 = vset.pattern.permute.xlu0 2
    %586 = vperm.xlu0 %585, %v69
    %v587 = vpop.permute.xlu0 %586
    %588 = vset.pattern.permute.xlu0 2
    %589 = vperm.xlu0 %588, %v70
    %v590 = vpop.permute.xlu0 %589
    %591 = vset.pattern.permute.xlu0 2
    %592 = vperm.xlu0 %591, %v71
    %v593 = vpop.permute.xlu0 %592
    %594 = vset.pattern.permute.xlu0 2
    %595 = vperm.xlu0 %594, %v72
    %v596 = vpop.permute.xlu0 %595
    %597 = vset.pattern.permute.xlu0 2
    %598 = vperm.xlu0 %597, %v73
    %v599 = vpop.permute.xlu0 %598
    %600 = vset.pattern.permute.xlu0 2
    %601 = vperm.xlu0 %600, %v74
    %v602 = vpop.permute.xlu0 %601
    %603 = vset.pattern.permute.xlu0 2
    %604 = vperm.xlu0 %603, %v75
    %v605 = vpop.permute.xlu0 %604
    %606 = vset.pattern.permute.xlu0 2
    %607 = vperm.xlu0 %606, %v76
    %v608 = vpop.permute.xlu0 %607
    %vm609 = vcmp.eq.s32.totalorder %v563, %v60
    %vm610 = vcmp.eq.s32.totalorder %v566, %v60
    %vm611 = vcmp.eq.s32.totalorder %v569, %v60
    %vm612 = vcmp.eq.s32.totalorder %v572, %v60
    %vm613 = vcmp.eq.s32.totalorder %v575, %v60
    %vm614 = vcmp.eq.s32.totalorder %v578, %v60
    %vm615 = vcmp.eq.s32.totalorder %v581, %v60
    %vm616 = vcmp.eq.s32.totalorder %v584, %v60
    %vm617 = vcmp.eq.s32.totalorder %v587, %v60
    %vm618 = vcmp.eq.s32.totalorder %v590, %v60
    %vm619 = vcmp.eq.s32.totalorder %v593, %v60
    %vm620 = vcmp.eq.s32.totalorder %v596, %v60
    %vm621 = vcmp.eq.s32.totalorder %v599, %v60
    %vm622 = vcmp.eq.s32.totalorder %v602, %v60
    %vm623 = vcmp.eq.s32.totalorder %v605, %v60
    %vm624 = vcmp.eq.s32.totalorder %v608, %v60
    %v625 = vsel %vm609, 1, 0
    %v626 = vsel %vm610, 1, 0
    %v627 = vsel %vm611, 1, 0
    %v628 = vsel %vm612, 1, 0
    %v629 = vsel %vm613, 1, 0
    %v630 = vsel %vm614, 1, 0
    %v631 = vsel %vm615, 1, 0
    %v632 = vsel %vm616, 1, 0
    %v633 = vsel %vm617, 1, 0
    %v634 = vsel %vm618, 1, 0
    %v635 = vsel %vm619, 1, 0
    %v636 = vsel %vm620, 1, 0
    %v637 = vsel %vm621, 1, 0
    %v638 = vsel %vm622, 1, 0
    %v639 = vsel %vm623, 1, 0
    %v640 = vsel %vm624, 1, 0
    %v641 = vcvt.s32.f32 %v625
    %v642 = vcvt.s32.f32 %v626
    %v643 = vcvt.s32.f32 %v627
    %v644 = vcvt.s32.f32 %v628
    %v645 = vcvt.s32.f32 %v629
    %v646 = vcvt.s32.f32 %v630
    %v647 = vcvt.s32.f32 %v631
    %v648 = vcvt.s32.f32 %v632
    %v649 = vcvt.s32.f32 %v633
    %v650 = vcvt.s32.f32 %v634
    %v651 = vcvt.s32.f32 %v635
    %v652 = vcvt.s32.f32 %v636
    %v653 = vcvt.s32.f32 %v637
    %v654 = vcvt.s32.f32 %v638
    %v655 = vcvt.s32.f32 %v639
    %v656 = vcvt.s32.f32 %v640
    %v657 = vpack.c.bf16 %v642, %v641
    %v658 = vpack.c.bf16 %v644, %v643
    %v659 = vpack.c.bf16 %v646, %v645
    %v660 = vpack.c.bf16 %v648, %v647
    %v661 = vpack.c.bf16 %v650, %v649
    %v662 = vpack.c.bf16 %v652, %v651
    %v663 = vpack.c.bf16 %v654, %v653
    %v664 = vpack.c.bf16 %v656, %v655
    %s665 = scalar_lea.vmem %s1, 32
    %v666 = vld [vmem:[%s665] sm:$0xf]
    %v667 = vld [vmem:[%s665 + $0x4] sm:$0xf]
    %v668 = vld [vmem:[%s665 + $0x8] sm:$0xf]
    %v669 = vld [vmem:[%s665 + $0xc] sm:$0xf]
    %v674 = vunpack.c.l.b16 %v666
    %v675 = vunpack.c.l.b16 %v667
    %v676 = vunpack.c.l.b16 %v668
    %v677 = vunpack.c.l.b16 %v669
    %v678 = vpack.c.b16 %v675, %v674
    %v679 = vpack.c.b16 %v677, %v676
    %v683 = vsel %vm306, %v657, 0
    %v686 = vsel %vm306, %v658, 0
    %v689 = vsel %vm306, %v659, 0
    %v692 = vsel %vm306, %v660, 0
    %v695 = vsel %vm306, %v661, 0
    %v698 = vsel %vm306, %v662, 0
    %v701 = vsel %vm306, %v663, 0
    %v704 = vsel %vm306, %v664, 0
    %706 = vmatprep.subr.bf16.mxu0 0
    %707 = vmatpush1.bf16.msra.mxu0 %v678
    %708 = vmatprep.subr.bf16.mxu0 0
    %709 = vmatpush1.bf16.msra.mxu0 %v679
    %710 = vmatprep.subr.bf16.mxu0 0
    %711 = vmatpush1.bf16.msra.mxu0 0
    %712 = vmatprep.subr.bf16.mxu0 0
    %713 = vmatpush1.bf16.msra.mxu0 0
    %714 = vmatprep.subr.bf16.mxu0 0
    %715 = vmatpush1.bf16.msra.mxu0 0
    %716 = vmatprep.subr.bf16.mxu0 0
    %717 = vmatpush1.bf16.msra.mxu0 0
    %718 = vmatprep.subr.bf16.mxu0 0
    %719 = vmatpush1.bf16.msra.mxu0 0
    %720 = vmatprep.subr.bf16.mxu0 0
    %721 = vmatpush1.bf16.msra.mxu0 0
    %722 = vmatprep.subr.bf16.mxu0 0
    %723 = vmatpush1.bf16.msra.mxu0 0
    %724 = vmatprep.subr.bf16.mxu0 0
    %725 = vmatpush1.bf16.msra.mxu0 0
    %726 = vmatprep.subr.bf16.mxu0 0
    %727 = vmatpush1.bf16.msra.mxu0 0
    %728 = vmatprep.subr.bf16.mxu0 0
    %729 = vmatpush1.bf16.msra.mxu0 0
    %730 = vmatprep.subr.bf16.mxu0 0
    %731 = vmatpush1.bf16.msra.mxu0 0
    %732 = vmatprep.subr.bf16.mxu0 0
    %733 = vmatpush1.bf16.msra.mxu0 0
    %734 = vmatprep.subr.bf16.mxu0 0
    %735 = vmatpush1.bf16.msra.mxu0 0
    %736 = vmatprep.subr.bf16.mxu0 0
    %737 = vmatpush1.bf16.msra.mxu0 0
    %738 = vmatprep.mubr.bf16.mxu0 0
    %739 = vmatmul.mubr.bf16.gmra.mrb[0].mxu0 %v683
    %v740 = vpop.f32.mrb[0].mxu0
    %v741 = vadd.f32 0.0, %v740
    %v742 = vpop.f32.mrb[0].mxu0
    %v743 = vpop.f32.mrb[0].mxu0
    %v744 = vadd.f32 0.0, %v743
    %v745 = vpop.f32.mrb[0].mxu0
    %746 = vmatprep.mubr.bf16.mxu0 0
    %747 = vmatmul.mubr.bf16.gmra.mrb[0].mxu0 %v686
    %v748 = vpop.f32.mrb[0].mxu0
    %v749 = vadd.f32 0.0, %v748
    %v750 = vpop.f32.mrb[0].mxu0
    %v751 = vpop.f32.mrb[0].mxu0
    %v752 = vadd.f32 0.0, %v751
    %v753 = vpop.f32.mrb[0].mxu0
    %754 = vmatprep.mubr.bf16.mxu0 0
    %755 = vmatmul.mubr.bf16.gmra.mrb[0].mxu0 %v689
    %v756 = vpop.f32.mrb[0].mxu0
    %v757 = vadd.f32 0.0, %v756
    %v758 = vpop.f32.mrb[0].mxu0
    %v759 = vpop.f32.mrb[0].mxu0
    %v760 = vadd.f32 0.0, %v759
    %v761 = vpop.f32.mrb[0].mxu0
    %762 = vmatprep.mubr.bf16.mxu0 0
    %763 = vmatmul.mubr.bf16.gmra.mrb[0].mxu0 %v692
    %v764 = vpop.f32.mrb[0].mxu0
    %v765 = vadd.f32 0.0, %v764
    %v766 = vpop.f32.mrb[0].mxu0
    %v767 = vpop.f32.mrb[0].mxu0
    %v768 = vadd.f32 0.0, %v767
    %v769 = vpop.f32.mrb[0].mxu0
    %770 = vmatprep.mubr.bf16.mxu0 0
    %771 = vmatmul.mubr.bf16.gmra.mrb[0].mxu0 %v695
    %v772 = vpop.f32.mrb[0].mxu0
    %v773 = vadd.f32 0.0, %v772
    %v774 = vpop.f32.mrb[0].mxu0
    %v775 = vpop.f32.mrb[0].mxu0
    %v776 = vadd.f32 0.0, %v775
    %v777 = vpop.f32.mrb[0].mxu0
    %778 = vmatprep.mubr.bf16.mxu0 0
    %779 = vmatmul.mubr.bf16.gmra.mrb[0].mxu0 %v698
    %v780 = vpop.f32.mrb[0].mxu0
    %v781 = vadd.f32 0.0, %v780
    %v782 = vpop.f32.mrb[0].mxu0
    %v783 = vpop.f32.mrb[0].mxu0
    %v784 = vadd.f32 0.0, %v783
    %v785 = vpop.f32.mrb[0].mxu0
    %786 = vmatprep.mubr.bf16.mxu0 0
    %787 = vmatmul.mubr.bf16.gmra.mrb[0].mxu0 %v701
    %v788 = vpop.f32.mrb[0].mxu0
    %v789 = vadd.f32 0.0, %v788
    %v790 = vpop.f32.mrb[0].mxu0
    %v791 = vpop.f32.mrb[0].mxu0
    %v792 = vadd.f32 0.0, %v791
    %v793 = vpop.f32.mrb[0].mxu0
    %794 = vmatprep.mubr.bf16.mxu0 0
    %795 = vmatmul.mubr.bf16.gmra.mrb[0].mxu0 %v704
    %v796 = vpop.f32.mrb[0].mxu0
    %v797 = vadd.f32 0.0, %v796
    %v798 = vpop.f32.mrb[0].mxu0
    %v799 = vpop.f32.mrb[0].mxu0
    %v800 = vadd.f32 0.0, %v799
    %v801 = vpop.f32.mrb[0].mxu0
    %802 = vdwg.mxu0
    %v803 = vadd.f32 %v499, %v741
    %v804 = vadd.f32 %v502, %v744
    %v805 = vadd.f32 %v507, %v749
    %v806 = vadd.f32 %v510, %v752
    %v807 = vadd.f32 %v515, %v757
    %v808 = vadd.f32 %v518, %v760
    %v809 = vadd.f32 %v523, %v765
    %v810 = vadd.f32 %v526, %v768
    %v811 = vadd.f32 %v531, %v773
    %v812 = vadd.f32 %v534, %v776
    %v813 = vadd.f32 %v539, %v781
    %v814 = vadd.f32 %v542, %v784
    %v815 = vadd.f32 %v547, %v789
    %v816 = vadd.f32 %v550, %v792
    %v817 = vadd.f32 %v555, %v797
    %v818 = vadd.f32 %v558, %v800
    %819 = vset.pattern.permute.xlu0 3
    %820 = vperm.xlu0 %819, %v61
    %v821 = vpop.permute.xlu0 %820
    %822 = vset.pattern.permute.xlu0 3
    %823 = vperm.xlu0 %822, %v62
    %v824 = vpop.permute.xlu0 %823
    %825 = vset.pattern.permute.xlu0 3
    %826 = vperm.xlu0 %825, %v63
    %v827 = vpop.permute.xlu0 %826
    %828 = vset.pattern.permute.xlu0 3
    %829 = vperm.xlu0 %828, %v64
    %v830 = vpop.permute.xlu0 %829
    %831 = vset.pattern.permute.xlu0 3
    %832 = vperm.xlu0 %831, %v65
    %v833 = vpop.permute.xlu0 %832
    %834 = vset.pattern.permute.xlu0 3
    %835 = vperm.xlu0 %834, %v66
    %v836 = vpop.permute.xlu0 %835
    %837 = vset.pattern.permute.xlu0 3
    %838 = vperm.xlu0 %837, %v67
    %v839 = vpop.permute.xlu0 %838
    %840 = vset.pattern.permute.xlu0 3
    %841 = vperm.xlu0 %840, %v68
    %v842 = vpop.permute.xlu0 %841
    %843 = vset.pattern.permute.xlu0 3
    %844 = vperm.xlu0 %843, %v69
    %v845 = vpop.permute.xlu0 %844
    %846 = vset.pattern.permute.xlu0 3
    %847 = vperm.xlu0 %846, %v70
    %v848 = vpop.permute.xlu0 %847
    %849 = vset.pattern.permute.xlu0 3
    %850 = vperm.xlu0 %849, %v71
    %v851 = vpop.permute.xlu0 %850
    %852 = vset.pattern.permute.xlu0 3
    %853 = vperm.xlu0 %852, %v72
    %v854 = vpop.permute.xlu0 %853
    %855 = vset.pattern.permute.xlu0 3
    %856 = vperm.xlu0 %855, %v73
    %v857 = vpop.permute.xlu0 %856
    %858 = vset.pattern.permute.xlu0 3
    %859 = vperm.xlu0 %858, %v74
    %v860 = vpop.permute.xlu0 %859
    %861 = vset.pattern.permute.xlu0 3
    %862 = vperm.xlu0 %861, %v75
    %v863 = vpop.permute.xlu0 %862
    %864 = vset.pattern.permute.xlu0 3
    %865 = vperm.xlu0 %864, %v76
    %v866 = vpop.permute.xlu0 %865
    %vm867 = vcmp.eq.s32.totalorder %v821, %v60
    %vm868 = vcmp.eq.s32.totalorder %v824, %v60
    %vm869 = vcmp.eq.s32.totalorder %v827, %v60
    %vm870 = vcmp.eq.s32.totalorder %v830, %v60
    %vm871 = vcmp.eq.s32.totalorder %v833, %v60
    %vm872 = vcmp.eq.s32.totalorder %v836, %v60
    %vm873 = vcmp.eq.s32.totalorder %v839, %v60
    %vm874 = vcmp.eq.s32.totalorder %v842, %v60
    %vm875 = vcmp.eq.s32.totalorder %v845, %v60
    %vm876 = vcmp.eq.s32.totalorder %v848, %v60
    %vm877 = vcmp.eq.s32.totalorder %v851, %v60
    %vm878 = vcmp.eq.s32.totalorder %v854, %v60
    %vm879 = vcmp.eq.s32.totalorder %v857, %v60
    %vm880 = vcmp.eq.s32.totalorder %v860, %v60
    %vm881 = vcmp.eq.s32.totalorder %v863, %v60
    %vm882 = vcmp.eq.s32.totalorder %v866, %v60
    %v883 = vsel %vm867, 1, 0
    %v884 = vsel %vm868, 1, 0
    %v885 = vsel %vm869, 1, 0
    %v886 = vsel %vm870, 1, 0
    %v887 = vsel %vm871, 1, 0
    %v888 = vsel %vm872, 1, 0
    %v889 = vsel %vm873, 1, 0
    %v890 = vsel %vm874, 1, 0
    %v891 = vsel %vm875, 1, 0
    %v892 = vsel %vm876, 1, 0
    %v893 = vsel %vm877, 1, 0
    %v894 = vsel %vm878, 1, 0
    %v895 = vsel %vm879, 1, 0
    %v896 = vsel %vm880, 1, 0
    %v897 = vsel %vm881, 1, 0
    %v898 = vsel %vm882, 1, 0
    %v899 = vcvt.s32.f32 %v883
    %v900 = vcvt.s32.f32 %v884
    %v901 = vcvt.s32.f32 %v885
    %v902 = vcvt.s32.f32 %v886
    %v903 = vcvt.s32.f32 %v887
    %v904 = vcvt.s32.f32 %v888
    %v905 = vcvt.s32.f32 %v889
    %v906 = vcvt.s32.f32 %v890
    %v907 = vcvt.s32.f32 %v891
    %v908 = vcvt.s32.f32 %v892
    %v909 = vcvt.s32.f32 %v893
    %v910 = vcvt.s32.f32 %v894
    %v911 = vcvt.s32.f32 %v895
    %v912 = vcvt.s32.f32 %v896
    %v913 = vcvt.s32.f32 %v897
    %v914 = vcvt.s32.f32 %v898
    %v915 = vpack.c.bf16 %v900, %v899
    %v916 = vpack.c.bf16 %v902, %v901
    %v917 = vpack.c.bf16 %v904, %v903
    %v918 = vpack.c.bf16 %v906, %v905
    %v919 = vpack.c.bf16 %v908, %v907
    %v920 = vpack.c.bf16 %v910, %v909
    %v921 = vpack.c.bf16 %v912, %v911
    %v922 = vpack.c.bf16 %v914, %v913
    %s923 = scalar_lea.vmem %s1, 48
    %v924 = vld [vmem:[%s923] sm:$0xf]
    %v925 = vld [vmem:[%s923 + $0x4] sm:$0xf]
    %v926 = vld [vmem:[%s923 + $0x8] sm:$0xf]
    %v927 = vld [vmem:[%s923 + $0xc] sm:$0xf]
    %v932 = vunpack.c.l.b16 %v924
    %v933 = vunpack.c.l.b16 %v925
    %v934 = vunpack.c.l.b16 %v926
    %v935 = vunpack.c.l.b16 %v927
    %v936 = vpack.c.b16 %v933, %v932
    %v937 = vpack.c.b16 %v935, %v934
    %v941 = vsel %vm306, %v915, 0
    %v944 = vsel %vm306, %v916, 0
    %v947 = vsel %vm306, %v917, 0
    %v950 = vsel %vm306, %v918, 0
    %v953 = vsel %vm306, %v919, 0
    %v956 = vsel %vm306, %v920, 0
    %v959 = vsel %vm306, %v921, 0
    %v962 = vsel %vm306, %v922, 0
    %964 = vmatprep.subr.bf16.mxu0 0
    %965 = vmatpush1.bf16.msra.mxu0 %v936
    %966 = vmatprep.subr.bf16.mxu0 0
    %967 = vmatpush1.bf16.msra.mxu0 %v937
    %968 = vmatprep.subr.bf16.mxu0 0
    %969 = vmatpush1.bf16.msra.mxu0 0
    %970 = vmatprep.subr.bf16.mxu0 0
    %971 = vmatpush1.bf16.msra.mxu0 0
    %972 = vmatprep.subr.bf16.mxu0 0
    %973 = vmatpush1.bf16.msra.mxu0 0
    %974 = vmatprep.subr.bf16.mxu0 0
    %975 = vmatpush1.bf16.msra.mxu0 0
    %976 = vmatprep.subr.bf16.mxu0 0
    %977 = vmatpush1.bf16.msra.mxu0 0
    %978 = vmatprep.subr.bf16.mxu0 0
    %979 = vmatpush1.bf16.msra.mxu0 0
    %980 = vmatprep.subr.bf16.mxu0 0
    %981 = vmatpush1.bf16.msra.mxu0 0
    %982 = vmatprep.subr.bf16.mxu0 0
    %983 = vmatpush1.bf16.msra.mxu0 0
    %984 = vmatprep.subr.bf16.mxu0 0
    %985 = vmatpush1.bf16.msra.mxu0 0
    %986 = vmatprep.subr.bf16.mxu0 0
    %987 = vmatpush1.bf16.msra.mxu0 0
    %988 = vmatprep.subr.bf16.mxu0 0
    %989 = vmatpush1.bf16.msra.mxu0 0
    %990 = vmatprep.subr.bf16.mxu0 0
    %991 = vmatpush1.bf16.msra.mxu0 0
    %992 = vmatprep.subr.bf16.mxu0 0
    %993 = vmatpush1.bf16.msra.mxu0 0
    %994 = vmatprep.subr.bf16.mxu0 0
    %995 = vmatpush1.bf16.msra.mxu0 0
    %996 = vmatprep.mubr.bf16.mxu0 0
    %997 = vmatmul.mubr.bf16.gmra.mrb[0].mxu0 %v941
    %v998 = vpop.f32.mrb[0].mxu0
    %v999 = vadd.f32 0.0, %v998
    %v1000 = vpop.f32.mrb[0].mxu0
    %v1001 = vpop.f32.mrb[0].mxu0
    %v1002 = vadd.f32 0.0, %v1001
    %v1003 = vpop.f32.mrb[0].mxu0
    %1004 = vmatprep.mubr.bf16.mxu0 0
    %1005 = vmatmul.mubr.bf16.gmra.mrb[0].mxu0 %v944
    %v1006 = vpop.f32.mrb[0].mxu0
    %v1007 = vadd.f32 0.0, %v1006
    %v1008 = vpop.f32.mrb[0].mxu0
    %v1009 = vpop.f32.mrb[0].mxu0
    %v1010 = vadd.f32 0.0, %v1009
    %v1011 = vpop.f32.mrb[0].mxu0
    %1012 = vmatprep.mubr.bf16.mxu0 0
    %1013 = vmatmul.mubr.bf16.gmra.mrb[0].mxu0 %v947
    %v1014 = vpop.f32.mrb[0].mxu0
    %v1015 = vadd.f32 0.0, %v1014
    %v1016 = vpop.f32.mrb[0].mxu0
    %v1017 = vpop.f32.mrb[0].mxu0
    %v1018 = vadd.f32 0.0, %v1017
    %v1019 = vpop.f32.mrb[0].mxu0
    %1020 = vmatprep.mubr.bf16.mxu0 0
    %1021 = vmatmul.mubr.bf16.gmra.mrb[0].mxu0 %v950
    %v1022 = vpop.f32.mrb[0].mxu0
    %v1023 = vadd.f32 0.0, %v1022
    %v1024 = vpop.f32.mrb[0].mxu0
    %v1025 = vpop.f32.mrb[0].mxu0
    %v1026 = vadd.f32 0.0, %v1025
    %v1027 = vpop.f32.mrb[0].mxu0
    %1028 = vmatprep.mubr.bf16.mxu0 0
    %1029 = vmatmul.mubr.bf16.gmra.mrb[0].mxu0 %v953
    %v1030 = vpop.f32.mrb[0].mxu0
    %v1031 = vadd.f32 0.0, %v1030
    %v1032 = vpop.f32.mrb[0].mxu0
    %v1033 = vpop.f32.mrb[0].mxu0
    %v1034 = vadd.f32 0.0, %v1033
    %v1035 = vpop.f32.mrb[0].mxu0
    %1036 = vmatprep.mubr.bf16.mxu0 0
    %1037 = vmatmul.mubr.bf16.gmra.mrb[0].mxu0 %v956
    %v1038 = vpop.f32.mrb[0].mxu0
    %v1039 = vadd.f32 0.0, %v1038
    %v1040 = vpop.f32.mrb[0].mxu0
    %v1041 = vpop.f32.mrb[0].mxu0
    %v1042 = vadd.f32 0.0, %v1041
    %v1043 = vpop.f32.mrb[0].mxu0
    %1044 = vmatprep.mubr.bf16.mxu0 0
    %1045 = vmatmul.mubr.bf16.gmra.mrb[0].mxu0 %v959
    %v1046 = vpop.f32.mrb[0].mxu0
    %v1047 = vadd.f32 0.0, %v1046
    %v1048 = vpop.f32.mrb[0].mxu0
    %v1049 = vpop.f32.mrb[0].mxu0
    %v1050 = vadd.f32 0.0, %v1049
    %v1051 = vpop.f32.mrb[0].mxu0
    %1052 = vmatprep.mubr.bf16.mxu0 0
    %1053 = vmatmul.mubr.bf16.gmra.mrb[0].mxu0 %v962
    %v1054 = vpop.f32.mrb[0].mxu0
    %v1055 = vadd.f32 0.0, %v1054
    %v1056 = vpop.f32.mrb[0].mxu0
    %v1057 = vpop.f32.mrb[0].mxu0
    %v1058 = vadd.f32 0.0, %v1057
    %v1059 = vpop.f32.mrb[0].mxu0
    %1060 = vdwg.mxu0
    %v1061 = vadd.f32 %v803, %v999
    %v1062 = vadd.f32 %v804, %v1002
    %v1063 = vadd.f32 %v805, %v1007
    %v1064 = vadd.f32 %v806, %v1010
    %v1065 = vadd.f32 %v807, %v1015
    %v1066 = vadd.f32 %v808, %v1018
    %v1067 = vadd.f32 %v809, %v1023
    %v1068 = vadd.f32 %v810, %v1026
    %v1069 = vadd.f32 %v811, %v1031
    %v1070 = vadd.f32 %v812, %v1034
    %v1071 = vadd.f32 %v813, %v1039
    %v1072 = vadd.f32 %v814, %v1042
    %v1073 = vadd.f32 %v815, %v1047
    %v1074 = vadd.f32 %v816, %v1050
    %v1075 = vadd.f32 %v817, %v1055
    %v1076 = vadd.f32 %v818, %v1058
    %1077 = vset.pattern.permute.xlu0 4
    %1078 = vperm.xlu0 %1077, %v61
    %v1079 = vpop.permute.xlu0 %1078
    %1080 = vset.pattern.permute.xlu0 4
    %1081 = vperm.xlu0 %1080, %v62
    %v1082 = vpop.permute.xlu0 %1081
    %1083 = vset.pattern.permute.xlu0 4
    %1084 = vperm.xlu0 %1083, %v63
    %v1085 = vpop.permute.xlu0 %1084
    %1086 = vset.pattern.permute.xlu0 4
    %1087 = vperm.xlu0 %1086, %v64
    %v1088 = vpop.permute.xlu0 %1087
    %1089 = vset.pattern.permute.xlu0 4
    %1090 = vperm.xlu0 %1089, %v65
    %v1091 = vpop.permute.xlu0 %1090
    %1092 = vset.pattern.permute.xlu0 4
    %1093 = vperm.xlu0 %1092, %v66
    %v1094 = vpop.permute.xlu0 %1093
    %1095 = vset.pattern.permute.xlu0 4
    %1096 = vperm.xlu0 %1095, %v67
    %v1097 = vpop.permute.xlu0 %1096
    %1098 = vset.pattern.permute.xlu0 4
    %1099 = vperm.xlu0 %1098, %v68
    %v1100 = vpop.permute.xlu0 %1099
    %1101 = vset.pattern.permute.xlu0 4
    %1102 = vperm.xlu0 %1101, %v69
    %v1103 = vpop.permute.xlu0 %1102
    %1104 = vset.pattern.permute.xlu0 4
    %1105 = vperm.xlu0 %1104, %v70
    %v1106 = vpop.permute.xlu0 %1105
    %1107 = vset.pattern.permute.xlu0 4
    %1108 = vperm.xlu0 %1107, %v71
    %v1109 = vpop.permute.xlu0 %1108
    %1110 = vset.pattern.permute.xlu0 4
    %1111 = vperm.xlu0 %1110, %v72
    %v1112 = vpop.permute.xlu0 %1111
    %1113 = vset.pattern.permute.xlu0 4
    %1114 = vperm.xlu0 %1113, %v73
    %v1115 = vpop.permute.xlu0 %1114
    %1116 = vset.pattern.permute.xlu0 4
    %1117 = vperm.xlu0 %1116, %v74
    %v1118 = vpop.permute.xlu0 %1117
    %1119 = vset.pattern.permute.xlu0 4
    %1120 = vperm.xlu0 %1119, %v75
    %v1121 = vpop.permute.xlu0 %1120
    %1122 = vset.pattern.permute.xlu0 4
    %1123 = vperm.xlu0 %1122, %v76
    %v1124 = vpop.permute.xlu0 %1123
    %vm1125 = vcmp.eq.s32.totalorder %v1079, %v60
    %vm1126 = vcmp.eq.s32.totalorder %v1082, %v60
    %vm1127 = vcmp.eq.s32.totalorder %v1085, %v60
    %vm1128 = vcmp.eq.s32.totalorder %v1088, %v60
    %vm1129 = vcmp.eq.s32.totalorder %v1091, %v60
    %vm1130 = vcmp.eq.s32.totalorder %v1094, %v60
    %vm1131 = vcmp.eq.s32.totalorder %v1097, %v60
    %vm1132 = vcmp.eq.s32.totalorder %v1100, %v60
    %vm1133 = vcmp.eq.s32.totalorder %v1103, %v60
    %vm1134 = vcmp.eq.s32.totalorder %v1106, %v60
    %vm1135 = vcmp.eq.s32.totalorder %v1109, %v60
    %vm1136 = vcmp.eq.s32.totalorder %v1112, %v60
    %vm1137 = vcmp.eq.s32.totalorder %v1115, %v60
    %vm1138 = vcmp.eq.s32.totalorder %v1118, %v60
    %vm1139 = vcmp.eq.s32.totalorder %v1121, %v60
    %vm1140 = vcmp.eq.s32.totalorder %v1124, %v60
    %v1141 = vsel %vm1125, 1, 0
    %v1142 = vsel %vm1126, 1, 0
    %v1143 = vsel %vm1127, 1, 0
    %v1144 = vsel %vm1128, 1, 0
    %v1145 = vsel %vm1129, 1, 0
    %v1146 = vsel %vm1130, 1, 0
    %v1147 = vsel %vm1131, 1, 0
    %v1148 = vsel %vm1132, 1, 0
    %v1149 = vsel %vm1133, 1, 0
    %v1150 = vsel %vm1134, 1, 0
    %v1151 = vsel %vm1135, 1, 0
    %v1152 = vsel %vm1136, 1, 0
    %v1153 = vsel %vm1137, 1, 0
    %v1154 = vsel %vm1138, 1, 0
    %v1155 = vsel %vm1139, 1, 0
    %v1156 = vsel %vm1140, 1, 0
    %v1157 = vcvt.s32.f32 %v1141
    %v1158 = vcvt.s32.f32 %v1142
    %v1159 = vcvt.s32.f32 %v1143
    %v1160 = vcvt.s32.f32 %v1144
    %v1161 = vcvt.s32.f32 %v1145
    %v1162 = vcvt.s32.f32 %v1146
    %v1163 = vcvt.s32.f32 %v1147
    %v1164 = vcvt.s32.f32 %v1148
    %v1165 = vcvt.s32.f32 %v1149
    %v1166 = vcvt.s32.f32 %v1150
    %v1167 = vcvt.s32.f32 %v1151
    %v1168 = vcvt.s32.f32 %v1152
    %v1169 = vcvt.s32.f32 %v1153
    %v1170 = vcvt.s32.f32 %v1154
    %v1171 = vcvt.s32.f32 %v1155
    %v1172 = vcvt.s32.f32 %v1156
    %v1173 = vpack.c.bf16 %v1158, %v1157
    %v1174 = vpack.c.bf16 %v1160, %v1159
    %v1175 = vpack.c.bf16 %v1162, %v1161
    %v1176 = vpack.c.bf16 %v1164, %v1163
    %v1177 = vpack.c.bf16 %v1166, %v1165
    %v1178 = vpack.c.bf16 %v1168, %v1167
    %v1179 = vpack.c.bf16 %v1170, %v1169
    %v1180 = vpack.c.bf16 %v1172, %v1171
    %s1181 = scalar_lea.vmem %s1, 64
    %v1182 = vld [vmem:[%s1181] sm:$0xf]
    %v1183 = vld [vmem:[%s1181 + $0x4] sm:$0xf]
    %v1184 = vld [vmem:[%s1181 + $0x8] sm:$0xf]
    %v1185 = vld [vmem:[%s1181 + $0xc] sm:$0xf]
    %v1190 = vunpack.c.l.b16 %v1182
    %v1191 = vunpack.c.l.b16 %v1183
    %v1192 = vunpack.c.l.b16 %v1184
    %v1193 = vunpack.c.l.b16 %v1185
    %v1194 = vpack.c.b16 %v1191, %v1190
    %v1195 = vpack.c.b16 %v1193, %v1192
    %v1199 = vsel %vm306, %v1173, 0
    %v1202 = vsel %vm306, %v1174, 0
    %v1205 = vsel %vm306, %v1175, 0
    %v1208 = vsel %vm306, %v1176, 0
    %v1211 = vsel %vm306, %v1177, 0
    %v1214 = vsel %vm306, %v1178, 0
    %v1217 = vsel %vm306, %v1179, 0
    %v1220 = vsel %vm306, %v1180, 0
    %1222 = vmatprep.subr.bf16.mxu0 0
    %1223 = vmatpush1.bf16.msra.mxu0 %v1194
    %1224 = vmatprep.subr.bf16.mxu0 0
    %1225 = vmatpush1.bf16.msra.mxu0 %v1195
    %1226 = vmatprep.subr.bf16.mxu0 0
    %1227 = vmatpush1.bf16.msra.mxu0 0
    %1228 = vmatprep.subr.bf16.mxu0 0
    %1229 = vmatpush1.bf16.msra.mxu0 0
    %1230 = vmatprep.subr.bf16.mxu0 0
    %1231 = vmatpush1.bf16.msra.mxu0 0
    %1232 = vmatprep.subr.bf16.mxu0 0
    %1233 = vmatpush1.bf16.msra.mxu0 0
    %1234 = vmatprep.subr.bf16.mxu0 0
    %1235 = vmatpush1.bf16.msra.mxu0 0
    %1236 = vmatprep.subr.bf16.mxu0 0
    %1237 = vmatpush1.bf16.msra.mxu0 0
    %1238 = vmatprep.subr.bf16.mxu0 0
    %1239 = vmatpush1.bf16.msra.mxu0 0
    %1240 = vmatprep.subr.bf16.mxu0 0
    %1241 = vmatpush1.bf16.msra.mxu0 0
    %1242 = vmatprep.subr.bf16.mxu0 0
    %1243 = vmatpush1.bf16.msra.mxu0 0
    %1244 = vmatprep.subr.bf16.mxu0 0
    %1245 = vmatpush1.bf16.msra.mxu0 0
    %1246 = vmatprep.subr.bf16.mxu0 0
    %1247 = vmatpush1.bf16.msra.mxu0 0
    %1248 = vmatprep.subr.bf16.mxu0 0
    %1249 = vmatpush1.bf16.msra.mxu0 0
    %1250 = vmatprep.subr.bf16.mxu0 0
    %1251 = vmatpush1.bf16.msra.mxu0 0
    %1252 = vmatprep.subr.bf16.mxu0 0
    %1253 = vmatpush1.bf16.msra.mxu0 0
    %1254 = vmatprep.mubr.bf16.mxu0 0
    %1255 = vmatmul.mubr.bf16.gmra.mrb[0].mxu0 %v1199
    %v1256 = vpop.f32.mrb[0].mxu0
    %v1257 = vadd.f32 0.0, %v1256
    %v1258 = vpop.f32.mrb[0].mxu0
    %v1259 = vpop.f32.mrb[0].mxu0
    %v1260 = vadd.f32 0.0, %v1259
    %v1261 = vpop.f32.mrb[0].mxu0
    %1262 = vmatprep.mubr.bf16.mxu0 0
    %1263 = vmatmul.mubr.bf16.gmra.mrb[0].mxu0 %v1202
    %v1264 = vpop.f32.mrb[0].mxu0
    %v1265 = vadd.f32 0.0, %v1264
    %v1266 = vpop.f32.mrb[0].mxu0
    %v1267 = vpop.f32.mrb[0].mxu0
    %v1268 = vadd.f32 0.0, %v1267
    %v1269 = vpop.f32.mrb[0].mxu0
    %1270 = vmatprep.mubr.bf16.mxu0 0
    %1271 = vmatmul.mubr.bf16.gmra.mrb[0].mxu0 %v1205
    %v1272 = vpop.f32.mrb[0].mxu0
    %v1273 = vadd.f32 0.0, %v1272
    %v1274 = vpop.f32.mrb[0].mxu0
    %v1275 = vpop.f32.mrb[0].mxu0
    %v1276 = vadd.f32 0.0, %v1275
    %v1277 = vpop.f32.mrb[0].mxu0
    %1278 = vmatprep.mubr.bf16.mxu0 0
    %1279 = vmatmul.mubr.bf16.gmra.mrb[0].mxu0 %v1208
    %v1280 = vpop.f32.mrb[0].mxu0
    %v1281 = vadd.f32 0.0, %v1280
    %v1282 = vpop.f32.mrb[0].mxu0
    %v1283 = vpop.f32.mrb[0].mxu0
    %v1284 = vadd.f32 0.0, %v1283
    %v1285 = vpop.f32.mrb[0].mxu0
    %1286 = vmatprep.mubr.bf16.mxu0 0
    %1287 = vmatmul.mubr.bf16.gmra.mrb[0].mxu0 %v1211
    %v1288 = vpop.f32.mrb[0].mxu0
    %v1289 = vadd.f32 0.0, %v1288
    %v1290 = vpop.f32.mrb[0].mxu0
    %v1291 = vpop.f32.mrb[0].mxu0
    %v1292 = vadd.f32 0.0, %v1291
    %v1293 = vpop.f32.mrb[0].mxu0
    %1294 = vmatprep.mubr.bf16.mxu0 0
    %1295 = vmatmul.mubr.bf16.gmra.mrb[0].mxu0 %v1214
    %v1296 = vpop.f32.mrb[0].mxu0
    %v1297 = vadd.f32 0.0, %v1296
    %v1298 = vpop.f32.mrb[0].mxu0
    %v1299 = vpop.f32.mrb[0].mxu0
    %v1300 = vadd.f32 0.0, %v1299
    %v1301 = vpop.f32.mrb[0].mxu0
    %1302 = vmatprep.mubr.bf16.mxu0 0
    %1303 = vmatmul.mubr.bf16.gmra.mrb[0].mxu0 %v1217
    %v1304 = vpop.f32.mrb[0].mxu0
    %v1305 = vadd.f32 0.0, %v1304
    %v1306 = vpop.f32.mrb[0].mxu0
    %v1307 = vpop.f32.mrb[0].mxu0
    %v1308 = vadd.f32 0.0, %v1307
    %v1309 = vpop.f32.mrb[0].mxu0
    %1310 = vmatprep.mubr.bf16.mxu0 0
    %1311 = vmatmul.mubr.bf16.gmra.mrb[0].mxu0 %v1220
    %v1312 = vpop.f32.mrb[0].mxu0
    %v1313 = vadd.f32 0.0, %v1312
    %v1314 = vpop.f32.mrb[0].mxu0
    %v1315 = vpop.f32.mrb[0].mxu0
    %v1316 = vadd.f32 0.0, %v1315
    %v1317 = vpop.f32.mrb[0].mxu0
    %1318 = vdwg.mxu0
    %v1319 = vadd.f32 %v1061, %v1257
    %v1320 = vadd.f32 %v1062, %v1260
    %v1321 = vadd.f32 %v1063, %v1265
    %v1322 = vadd.f32 %v1064, %v1268
    %v1323 = vadd.f32 %v1065, %v1273
    %v1324 = vadd.f32 %v1066, %v1276
    %v1325 = vadd.f32 %v1067, %v1281
    %v1326 = vadd.f32 %v1068, %v1284
    %v1327 = vadd.f32 %v1069, %v1289
    %v1328 = vadd.f32 %v1070, %v1292
    %v1329 = vadd.f32 %v1071, %v1297
    %v1330 = vadd.f32 %v1072, %v1300
    %v1331 = vadd.f32 %v1073, %v1305
    %v1332 = vadd.f32 %v1074, %v1308
    %v1333 = vadd.f32 %v1075, %v1313
    %v1334 = vadd.f32 %v1076, %v1316
    %v1335 = vld [vmem:[#allocation2] sm:$0xff]
    %v1336 = vld [vmem:[#allocation2 + $0x8] sm:$0xff]
    %v1337 = vadd.f32 %v1319, %v1335
    %v1338 = vadd.f32 %v1320, %v1336
    %v1339 = vadd.f32 %v1321, %v1335
    %v1340 = vadd.f32 %v1322, %v1336
    %v1341 = vadd.f32 %v1323, %v1335
    %v1342 = vadd.f32 %v1324, %v1336
    %v1343 = vadd.f32 %v1325, %v1335
    %v1344 = vadd.f32 %v1326, %v1336
    %v1345 = vadd.f32 %v1327, %v1335
    %v1346 = vadd.f32 %v1328, %v1336
    %v1347 = vadd.f32 %v1329, %v1335
    %v1348 = vadd.f32 %v1330, %v1336
    %v1349 = vadd.f32 %v1331, %v1335
    %v1350 = vadd.f32 %v1332, %v1336
    %v1351 = vadd.f32 %v1333, %v1335
    %v1352 = vadd.f32 %v1334, %v1336
    %v1353 = vmax.f32 %v1337, %v1338
    %v1354 = vrot.slane %v1353, 4
    %v1355 = vmax.f32 %v1353, %v1354
    %v1356 = vrot.slane %v1355, 2
    %v1357 = vmax.f32 %v1355, %v1356
    %v1358 = vrot.slane %v1357, 1
    %v1359 = vmax.f32 %v1357, %v1358
    %v1360 = vmax.f32 %v1339, %v1340
    %v1361 = vrot.slane %v1360, 4
    %v1362 = vmax.f32 %v1360, %v1361
    %v1363 = vrot.slane %v1362, 2
    %v1364 = vmax.f32 %v1362, %v1363
    %v1365 = vrot.slane %v1364, 1
    %v1366 = vmax.f32 %v1364, %v1365
    %v1367 = vmax.f32 %v1341, %v1342
    %v1368 = vrot.slane %v1367, 4
    %v1369 = vmax.f32 %v1367, %v1368
    %v1370 = vrot.slane %v1369, 2
    %v1371 = vmax.f32 %v1369, %v1370
    %v1372 = vrot.slane %v1371, 1
    %v1373 = vmax.f32 %v1371, %v1372
    %v1374 = vmax.f32 %v1343, %v1344
    %v1375 = vrot.slane %v1374, 4
    %v1376 = vmax.f32 %v1374, %v1375
    %v1377 = vrot.slane %v1376, 2
    %v1378 = vmax.f32 %v1376, %v1377
    %v1379 = vrot.slane %v1378, 1
    %v1380 = vmax.f32 %v1378, %v1379
    %v1381 = vmax.f32 %v1345, %v1346
    %v1382 = vrot.slane %v1381, 4
    %v1383 = vmax.f32 %v1381, %v1382
    %v1384 = vrot.slane %v1383, 2
    %v1385 = vmax.f32 %v1383, %v1384
    %v1386 = vrot.slane %v1385, 1
    %v1387 = vmax.f32 %v1385, %v1386
    %v1388 = vmax.f32 %v1347, %v1348
    %v1389 = vrot.slane %v1388, 4
    %v1390 = vmax.f32 %v1388, %v1389
    %v1391 = vrot.slane %v1390, 2
    %v1392 = vmax.f32 %v1390, %v1391
    %v1393 = vrot.slane %v1392, 1
    %v1394 = vmax.f32 %v1392, %v1393
    %v1395 = vmax.f32 %v1349, %v1350
    %v1396 = vrot.slane %v1395, 4
    %v1397 = vmax.f32 %v1395, %v1396
    %v1398 = vrot.slane %v1397, 2
    %v1399 = vmax.f32 %v1397, %v1398
    %v1400 = vrot.slane %v1399, 1
    %v1401 = vmax.f32 %v1399, %v1400
    %v1402 = vmax.f32 %v1351, %v1352
    %v1403 = vrot.slane %v1402, 4
    %v1404 = vmax.f32 %v1402, %v1403
    %v1405 = vrot.slane %v1404, 2
    %v1406 = vmax.f32 %v1404, %v1405
    %v1407 = vrot.slane %v1406, 1
    %v1408 = vmax.f32 %v1406, %v1407
    %v1409 = vld [vmem:[%s2] sm:$0x1]
    %v1411 = vlaneseq
    %v1412 = vshrl.u32 %v1411, 7
    %v1413 = vsub.s32 0, %v1412
    %v1414 = vrot.slane %v1409, %v1413
    %v1416 = vadd.f32 %v1359, %v1414
    %v1417 = vadd.f32 %v1366, %v1414
    %v1418 = vadd.f32 %v1373, %v1414
    %v1419 = vadd.f32 %v1380, %v1414
    %v1420 = vadd.f32 %v1387, %v1414
    %v1421 = vadd.f32 %v1394, %v1414
    %v1422 = vadd.f32 %v1401, %v1414
    %v1423 = vadd.f32 %v1408, %v1414
    %v1424 = vmax.f32 %v1416, 0.0
    %v1425 = vmax.f32 %v1417, 0.0
    %v1426 = vmax.f32 %v1418, 0.0
    %v1427 = vmax.f32 %v1419, 0.0
    %v1428 = vmax.f32 %v1420, 0.0
    %v1429 = vmax.f32 %v1421, 0.0
    %v1430 = vmax.f32 %v1422, 0.0
    %v1431 = vmax.f32 %v1423, 0.0
    %v1432 = vpack.c.bf16 %v1424, %v1424
    %v1433 = vpack.c.bf16 %v1425, %v1425
    %v1434 = vpack.c.bf16 %v1426, %v1426
    %v1435 = vpack.c.bf16 %v1427, %v1427
    %v1436 = vpack.c.bf16 %v1428, %v1428
    %v1437 = vpack.c.bf16 %v1429, %v1429
    %v1438 = vpack.c.bf16 %v1430, %v1430
    %v1439 = vpack.c.bf16 %v1431, %v1431
    %v1440 = vld [vmem:[%s4] sm:$0xf]
    %v1441 = vld [vmem:[%s4 + $0x4] sm:$0xf]
    %v1442 = vld [vmem:[%s4 + $0x8] sm:$0xf]
    %v1443 = vld [vmem:[%s4 + $0xc] sm:$0xf]
    %v1444 = vld [vmem:[%s4 + $0x10] sm:$0xf]
    %v1445 = vld [vmem:[%s4 + $0x14] sm:$0xf]
    %v1446 = vld [vmem:[%s4 + $0x18] sm:$0xf]
    %v1447 = vld [vmem:[%s4 + $0x1c] sm:$0xf]
    %v1448 = vld [vmem:[%s4 + $0x20] sm:$0xf]
    %v1449 = vld [vmem:[%s4 + $0x24] sm:$0xf]
    %v1450 = vld [vmem:[%s4 + $0x28] sm:$0xf]
    %v1451 = vld [vmem:[%s4 + $0x2c] sm:$0xf]
    %v1452 = vld [vmem:[%s4 + $0x30] sm:$0xf]
    %v1453 = vld [vmem:[%s4 + $0x34] sm:$0xf]
    %v1454 = vld [vmem:[%s4 + $0x38] sm:$0xf]
    %v1455 = vld [vmem:[%s4 + $0x3c] sm:$0xf]
    %v1456 = vld [vmem:[%s5] sm:$0x1]
    %v1458 = vlaneseq
    %v1459 = vshrl.u32 %v1458, 7
    %v1460 = vsub.s32 0, %v1459
    %v1461 = vrot.slane %v1456, %v1460
    %v1471 = vunpack.c.l.b16 %v1432
    %v1472 = vunpack.c.l.b16 %v1433
    %v1473 = vunpack.c.l.b16 %v1434
    %v1474 = vunpack.c.l.b16 %v1435
    %v1475 = vunpack.c.l.b16 %v1436
    %v1476 = vunpack.c.l.b16 %v1437
    %v1477 = vunpack.c.l.b16 %v1438
    %v1478 = vunpack.c.l.b16 %v1439
    %v1479 = vrot.slane %v1472, 7
    %vm1480 = vcmask 1041409
    %v1481 = vsel %vm1480, %v1479, %v1471
    %v1482 = vrot.slane %v1473, 6
    %vm1483 = vcmask 1042434
    %v1484 = vsel %vm1483, %v1482, %v1481
    %v1485 = vrot.slane %v1474, 5
    %vm1486 = vcmask 1043459
    %v1487 = vsel %vm1486, %v1485, %v1484
    %v1488 = vrot.slane %v1475, 4
    %vm1489 = vcmask 1044484
    %v1490 = vsel %vm1489, %v1488, %v1487
    %v1491 = vrot.slane %v1476, 3
    %vm1492 = vcmask 1045509
    %v1493 = vsel %vm1492, %v1491, %v1490
    %v1494 = vrot.slane %v1477, 2
    %vm1495 = vcmask 1046534
    %v1496 = vsel %vm1495, %v1494, %v1493
    %v1497 = vrot.slane %v1478, 1
    %vm1498 = vcmask 1047559
    %v1499 = vsel %vm1498, %v1497, %v1496
    %v1500 = vpack.c.b16 %v1499, %v1499
    %v1518 = vunpack.c.l.b16 %v1440
    %v1519 = vunpack.c.l.b16 %v1441
    %v1520 = vunpack.c.l.b16 %v1442
    %v1521 = vunpack.c.l.b16 %v1443
    %v1522 = vunpack.c.l.b16 %v1444
    %v1523 = vunpack.c.l.b16 %v1445
    %v1524 = vunpack.c.l.b16 %v1446
    %v1525 = vunpack.c.l.b16 %v1447
    %v1526 = vunpack.c.l.b16 %v1448
    %v1527 = vunpack.c.l.b16 %v1449
    %v1528 = vunpack.c.l.b16 %v1450
    %v1529 = vunpack.c.l.b16 %v1451
    %v1530 = vunpack.c.l.b16 %v1452
    %v1531 = vunpack.c.l.b16 %v1453
    %v1532 = vunpack.c.l.b16 %v1454
    %v1533 = vunpack.c.l.b16 %v1455
    %v1534 = vpack.c.b16 %v1519, %v1518
    %v1535 = vpack.c.b16 %v1521, %v1520
    %v1536 = vpack.c.b16 %v1523, %v1522
    %v1537 = vpack.c.b16 %v1525, %v1524
    %v1538 = vpack.c.b16 %v1527, %v1526
    %v1539 = vpack.c.b16 %v1529, %v1528
    %v1540 = vpack.c.b16 %v1531, %v1530
    %v1541 = vpack.c.b16 %v1533, %v1532
    %1550 = vmatprep.subr.bf16.mxu0 0
    %1551 = vmatpush1.bf16.msra.mxu0 %v1534
    %1552 = vmatprep.subr.bf16.mxu0 0
    %1553 = vmatpush1.bf16.msra.mxu0 %v1535
    %1554 = vmatprep.subr.bf16.mxu0 0
    %1555 = vmatpush1.bf16.msra.mxu0 %v1536
    %1556 = vmatprep.subr.bf16.mxu0 0
    %1557 = vmatpush1.bf16.msra.mxu0 %v1537
    %1558 = vmatprep.subr.bf16.mxu0 0
    %1559 = vmatpush1.bf16.msra.mxu0 %v1538
    %1560 = vmatprep.subr.bf16.mxu0 0
    %1561 = vmatpush1.bf16.msra.mxu0 %v1539
    %1562 = vmatprep.subr.bf16.mxu0 0
    %1563 = vmatpush1.bf16.msra.mxu0 %v1540
    %1564 = vmatprep.subr.bf16.mxu0 0
    %1565 = vmatpush1.bf16.msra.mxu0 %v1541
    %1566 = vmatprep.subr.bf16.mxu0 0
    %1567 = vmatpush1.bf16.msra.mxu0 0
    %1568 = vmatprep.subr.bf16.mxu0 0
    %1569 = vmatpush1.bf16.msra.mxu0 0
    %1570 = vmatprep.subr.bf16.mxu0 0
    %1571 = vmatpush1.bf16.msra.mxu0 0
    %1572 = vmatprep.subr.bf16.mxu0 0
    %1573 = vmatpush1.bf16.msra.mxu0 0
    %1574 = vmatprep.subr.bf16.mxu0 0
    %1575 = vmatpush1.bf16.msra.mxu0 0
    %1576 = vmatprep.subr.bf16.mxu0 0
    %1577 = vmatpush1.bf16.msra.mxu0 0
    %1578 = vmatprep.subr.bf16.mxu0 0
    %1579 = vmatpush1.bf16.msra.mxu0 0
    %1580 = vmatprep.subr.bf16.mxu0 0
    %1581 = vmatpush1.bf16.msra.mxu0 0
    %1582 = vmatprep.mubr.bf16.mxu0 0
    %1583 = vmatmul.mubr.bf16.gmra.mrb[0].mxu0 %v1500
    %v1584 = vpop.f32.mrb[0].mxu0
    %v1585 = vadd.f32 %v1461, %v1584
    %v1586 = vpop.f32.mrb[0].mxu0
    %v1587 = vpop.f32.mrb[0].mxu0
    %v1588 = vpop.f32.mrb[0].mxu0
    %1589 = vdwg.mxu0
    %v1590 = vmax.f32 %v1585, 0.0
    %v1591 = vpack.c.bf16 %v1590, %v1590
    %v1592 = vld [vmem:[#allocation5] sm:$0xf]
    %v1593 = vld [vmem:[#allocation5 + $0x4] sm:$0xf]
    %v1594 = vld [vmem:[#allocation5 + $0x8] sm:$0xf]
    %v1595 = vld [vmem:[#allocation5 + $0xc] sm:$0xf]
    %v1596 = vld [vmem:[#allocation5 + $0x10] sm:$0xf]
    %v1597 = vld [vmem:[#allocation5 + $0x14] sm:$0xf]
    %v1598 = vld [vmem:[#allocation5 + $0x18] sm:$0xf]
    %v1599 = vld [vmem:[#allocation5 + $0x1c] sm:$0xf]
    %v1600 = vld [vmem:[#allocation5 + $0x20] sm:$0xf]
    %v1601 = vld [vmem:[#allocation5 + $0x24] sm:$0xf]
    %v1602 = vld [vmem:[#allocation5 + $0x28] sm:$0xf]
    %v1603 = vld [vmem:[#allocation5 + $0x2c] sm:$0xf]
    %v1604 = vld [vmem:[#allocation5 + $0x30] sm:$0xf]
    %v1605 = vld [vmem:[#allocation5 + $0x34] sm:$0xf]
    %v1606 = vld [vmem:[#allocation5 + $0x38] sm:$0xf]
    %v1607 = vld [vmem:[#allocation5 + $0x3c] sm:$0xf]
    %v1608 = vld [vmem:[%s7] sm:$0x1]
    %v1610 = vlaneseq
    %v1611 = vshrl.u32 %v1610, 7
    %v1612 = vsub.s32 0, %v1611
    %v1613 = vrot.slane %v1608, %v1612
    %v1631 = vunpack.c.l.b16 %v1592
    %v1632 = vunpack.c.l.b16 %v1593
    %v1633 = vunpack.c.l.b16 %v1594
    %v1634 = vunpack.c.l.b16 %v1595
    %v1635 = vunpack.c.l.b16 %v1596
    %v1636 = vunpack.c.l.b16 %v1597
    %v1637 = vunpack.c.l.b16 %v1598
    %v1638 = vunpack.c.l.b16 %v1599
    %v1639 = vunpack.c.l.b16 %v1600
    %v1640 = vunpack.c.l.b16 %v1601
    %v1641 = vunpack.c.l.b16 %v1602
    %v1642 = vunpack.c.l.b16 %v1603
    %v1643 = vunpack.c.l.b16 %v1604
    %v1644 = vunpack.c.l.b16 %v1605
    %v1645 = vunpack.c.l.b16 %v1606
    %v1646 = vunpack.c.l.b16 %v1607
    %v1647 = vpack.c.b16 %v1632, %v1631
    %v1648 = vpack.c.b16 %v1634, %v1633
    %v1649 = vpack.c.b16 %v1636, %v1635
    %v1650 = vpack.c.b16 %v1638, %v1637
    %v1651 = vpack.c.b16 %v1640, %v1639
    %v1652 = vpack.c.b16 %v1642, %v1641
    %v1653 = vpack.c.b16 %v1644, %v1643
    %v1654 = vpack.c.b16 %v1646, %v1645
    %1663 = vmatprep.subr.bf16.mxu0 0
    %1664 = vmatpush1.bf16.msra.mxu0 %v1647
    %1665 = vmatprep.subr.bf16.mxu0 0
    %1666 = vmatpush1.bf16.msra.mxu0 %v1648
    %1667 = vmatprep.subr.bf16.mxu0 0
    %1668 = vmatpush1.bf16.msra.mxu0 %v1649
    %1669 = vmatprep.subr.bf16.mxu0 0
    %1670 = vmatpush1.bf16.msra.mxu0 %v1650
    %1671 = vmatprep.subr.bf16.mxu0 0
    %1672 = vmatpush1.bf16.msra.mxu0 %v1651
    %1673 = vmatprep.subr.bf16.mxu0 0
    %1674 = vmatpush1.bf16.msra.mxu0 %v1652
    %1675 = vmatprep.subr.bf16.mxu0 0
    %1676 = vmatpush1.bf16.msra.mxu0 %v1653
    %1677 = vmatprep.subr.bf16.mxu0 0
    %1678 = vmatpush1.bf16.msra.mxu0 %v1654
    %1679 = vmatprep.subr.bf16.mxu0 0
    %1680 = vmatpush1.bf16.msra.mxu0 0
    %1681 = vmatprep.subr.bf16.mxu0 0
    %1682 = vmatpush1.bf16.msra.mxu0 0
    %1683 = vmatprep.subr.bf16.mxu0 0
    %1684 = vmatpush1.bf16.msra.mxu0 0
    %1685 = vmatprep.subr.bf16.mxu0 0
    %1686 = vmatpush1.bf16.msra.mxu0 0
    %1687 = vmatprep.subr.bf16.mxu0 0
    %1688 = vmatpush1.bf16.msra.mxu0 0
    %1689 = vmatprep.subr.bf16.mxu0 0
    %1690 = vmatpush1.bf16.msra.mxu0 0
    %1691 = vmatprep.subr.bf16.mxu0 0
    %1692 = vmatpush1.bf16.msra.mxu0 0
    %1693 = vmatprep.subr.bf16.mxu0 0
    %1694 = vmatpush1.bf16.msra.mxu0 0
    %1695 = vmatprep.mubr.bf16.mxu0 0
    %1696 = vmatmul.mubr.bf16.gmra.mrb[0].mxu0 %v1591
    %v1697 = vpop.f32.mrb[0].mxu0
    %v1698 = vadd.f32 %v1613, %v1697
    %v1699 = vpop.f32.mrb[0].mxu0
    %v1700 = vpop.f32.mrb[0].mxu0
    %v1701 = vpop.f32.mrb[0].mxu0
    %1702 = vdwg.mxu0
    %v1703 = vxor.u32 %v1698, 2147483648
    %v1704 = vmul.f32 %v1703, 1.442695
    %v1705 = vpow.pop %v1704
    %v1706 = vadd.f32 %v1705, 1.0
    %v1707 = vrcp.pop %v1706
    %v1708 = vmul.f32 1.0, %v1707
    %1709 = vst [vmem:[#allocation7] sm:$0xff] %v1708
    // Predicated region
    $region42: #{tpu_custom_call.1} parent=1 // pred_check
      _
    $region43: #{tpu_custom_call.1} parent=1 // pred_check_branch
      %1711 = sbr.rel (0) target = $region45
    $region44: #{tpu_custom_call.1} parent=1 // pred_region
      %s1713 = ssub.s32 128, 128
      %1714 = vsyncadd [#allocation4], %s1713
      %s1716 = sshll.u32 [#allocation7], 4
      %s1717 = int_to_ptr.vmem [resolvable:$true] %s1716
      %1719 = dma.vmem_to_hbm [thread:$0]  %s1717, 128, %s8, [#allocation4]
    $region45: #{tpu_custom_call.1} parent=1 // pred_fallthru
      _
    // Predicated region
    $region46: #{tpu_custom_call.1} parent=1 // pred_check
      _
    $region47: #{tpu_custom_call.1} parent=1 // pred_check_branch
      %1721 = sbr.rel (0) target = $region49
    $region48: #{tpu_custom_call.1} parent=1 // pred_region
      %1722 = dma.done [#allocation4], 128
    $region49: #{tpu_custom_call.1} parent=1 // pred_fallthru
      _
    %1723 = vsyncpa [#allocation3], 1
    %1724 = vsyncpa [#allocation6], 1
    %1725 = vsyncpa [#allocation4], 1

</llo_original>
